<compile_context>
chip_gen: v5e
topology: v5e:2x2
jax: 0.10.0
libtpu: 0.0.40
codegen_flags: <defaults>
</compile_context>

<pallas_src>
import functools

import jax
import jax.numpy as jnp
from jax.experimental import pallas as pl
from jax.experimental.pallas import tpu as pltpu


# ---------------------------------------------------------------------------
# Small helpers shared by the kernels
# ---------------------------------------------------------------------------
def _pointwise_conv(w, x):
    """(O, I) x (I, T) -> (O, T) in f32. Broadcast-FMA for tiny contraction dims."""
    _, i_dim = w.shape
    if i_dim <= 8:
        out = w[:, 0:1] * x[0:1, :]
        for c in range(1, i_dim):
            out = out + w[:, c:c + 1] * x[c:c + 1, :]
        return out
    return jnp.dot(w, x, preferred_element_type=jnp.float32)


def _gelu_exact(y):
    return 0.5 * y * (1.0 + jax.lax.erf(y * 0.7071067811865476))


# ---------------------------------------------------------------------------
# Pass 1: depthwise conv + GroupNorm partial sums + residual extraction
#   x_hbm    : (N, C, Dstore*Lpad) padded volume, left in HBM (pl.ANY)
#   mask_ref : (1, T)      validity mask for this depth tile
#   wdw_ref  : (K^3, C, 1) depthwise taps, bdw_ref: (C, 1)
#   outputs  : h (1,C,T), xres (1,C,T), per-tile partial sums (1,1,C,1) x 2
# ---------------------------------------------------------------------------
def _pass1_dwconv_kernel(K, pad, Wp, Lpad, TD, C,
                         x_hbm, mask_ref, wdw_ref, bdw_ref,
                         h_ref, xres_ref, ps1_ref, ps2_ref,
                         xbuf, sem):
    n = pl.program_id(0)
    td = pl.program_id(1)
    tile_out = TD * Lpad
    tile_in = (TD + 2 * pad) * Lpad

    # Fetch the halo'd depth slab [td*TD, td*TD + TD + 2*pad) of the padded volume.
    start = pl.multiple_of(td * tile_out, 128)
    cp = pltpu.make_async_copy(x_hbm.at[n, :, pl.ds(start, tile_in)], xbuf, sem)
    cp.start()
    cp.wait()

    xt = xbuf[...]                        # (C, tile_in) f32
    wdw = wdw_ref[...]                    # (K^3, C, 1)
    mask = mask_ref[...]                  # (1, tile_out)

    acc = jnp.zeros((C, tile_out), jnp.float32)
    x_res = None
    # K^2 genuine lane rotations (in-plane kh/kw offsets); the K depth (kd) taps per
    # rotation are 128-aligned static lane-window slices (cheap vreg re-indexing).
    for kh in range(K):
        for kw in range(K):
            offp = kh * Wp + kw
            rolled = pltpu.roll(xt, shift=tile_in - offp, axis=1) if offp else xt
            if kh == pad and kw == pad:
                # centre tap (kd=pad) is the original, unpadded input -> residual source
                x_res = rolled[:, pad * Lpad: pad * Lpad + tile_out]
            for kd in range(K):
                tap = rolled[:, kd * Lpad: kd * Lpad + tile_out]
                acc = acc + tap * wdw[(kd * K + kh) * K + kw]
    # TODO(synk): for K >= 5 wrap the kd accumulation in a lax.fori_loop to bound
    # trace-time unrolling (125/343 taps) and vreg live ranges.

    h = (acc + bdw_ref[...]) * mask       # zero out padding / invalid-depth positions
    h_ref[0] = h
    xres_ref[0] = x_res
    ps1_ref[0, 0] = jnp.sum(h, axis=1, keepdims=True)
    ps2_ref[0, 0] = jnp.sum(h * h, axis=1, keepdims=True)


# ---------------------------------------------------------------------------
# Pass 2: GN normalize + conv2 + exact GELU, accumulate GRN sum-of-squares per tile
# ---------------------------------------------------------------------------
def _pass2_grn_stats_kernel(h_ref, mask_ref, cpar_ref, w2_ref, b2_ref, psq_ref):
    hn = h_ref[0] * cpar_ref[0, :, 0:1] + cpar_ref[0, :, 1:2]
    y = _gelu_exact(_pointwise_conv(w2_ref[...], hn) + b2_ref[...])
    y = y * mask_ref[...]
    psq_ref[0, 0] = jnp.sum(y * y, axis=1, keepdims=True)


# ---------------------------------------------------------------------------
# Pass 3: GN + conv2 + GELU (recomputed) + GRN + conv3 + residual
# ---------------------------------------------------------------------------
def _pass3_output_kernel(h_ref, xres_ref, cpar_ref, w2_ref, b2_ref,
                         ga_ref, gb_ref, w3_ref, b3_ref, out_ref):
    hn = h_ref[0] * cpar_ref[0, :, 0:1] + cpar_ref[0, :, 1:2]
    y = _gelu_exact(_pointwise_conv(w2_ref[...], hn) + b2_ref[...])
    y = y * ga_ref[0] + gb_ref[...]                 # GRN folded to y * (gamma*nx + 1) + beta
    z = _pointwise_conv(w3_ref[...], y) + b3_ref[...]
    out_ref[0] = z + xres_ref[0]


# ---------------------------------------------------------------------------
# VMEM-budget-aware tiling
# ---------------------------------------------------------------------------
def _choose_depth_tile(C, E, D, Lpad, pad, budget_bytes):
    # rough worst-pass (pass 2/3) live bytes per output depth plane
    per_plane = 4 * Lpad * (10 * C + 2 * E)
    halo = 4 * Lpad * (2 * pad) * C + (2 << 20)
    td = (budget_bytes - halo) // max(per_plane, 1)
    return int(max(1, min(D, td)))


def _vmem_request(C, E, TD, Lpad, pad):
    t = TD * Lpad
    t_in = (TD + 2 * pad) * Lpad
    p1 = 4 * (C * t_in + 4 * C * t + 2 * (2 * C * t + t))       # pass 1 estimate
    p3 = 4 * (8 * C * t + 2 * E * t + 2 * t)                    # pass 2/3 estimate
    need = max(p1, p3) + (4 << 20)
    return int(min(max(need, 32 << 20), 100 << 20))


# ---------------------------------------------------------------------------
# Wrapper (PyTorch-style NCDHW in / NCDHW out)
# ---------------------------------------------------------------------------
def mednext_block_forward(x, params, *, max_tile_planes=None,
                          vmem_budget_bytes=40 * 1024 * 1024):
    N, C, D, H, W = x.shape
    K = int(params["kernel_size"])
    assert K % 2 == 1, "MedNeXt depthwise conv assumes an odd kernel size"
    pad = K // 2
    E = params["w2"].shape[0]
    Hp, Wp = H + 2 * pad, W + 2 * pad
    L = Hp * Wp
    Lpad = ((L + 127) // 128) * 128        # lane-aligned plane stride -> kd taps are free
    S = D * H * W

    TD = _choose_depth_tile(C, E, D, Lpad, pad, vmem_budget_bytes)
    if max_tile_planes is not None:
        TD = max(1, min(TD, int(max_tile_planes)))
    nTd = -(-D // TD)                      # ceil(D / TD)
    Ds = nTd * TD                          # stored output depth planes (>= D)
    Dstore = Ds + 2 * pad                  # stored padded input depth planes
    T = TD * Lpad
    Tin = (TD + 2 * pad) * Lpad
    vmem_req = _vmem_request(C, E, TD, Lpad, pad)

    x = x.astype(jnp.float32)
    # TODO(synk): when chaining MedNeXt blocks, keep activations in this padded
    # lane-dense layout between blocks to avoid the pad / final-slice HBM round trips.
    xp = jnp.pad(x, ((0, 0), (0, 0), (pad, Dstore - D - pad), (pad, pad), (pad, pad)))
    xp = xp.reshape(N, C, Dstore, L)
    xp = jnp.pad(xp, ((0, 0), (0, 0), (0, 0), (0, Lpad - L))).reshape(N, C, Dstore * Lpad)

    # validity mask over the stored output layout (1 at real voxels, 0 elsewhere)
    plane = ((jnp.arange(Hp) < H)[:, None] & (jnp.arange(Wp) < W)[None, :])
    plane = jnp.pad(plane.reshape(-1).astype(jnp.float32), (0, Lpad - L))
    dvalid = (jnp.arange(Ds) < D).astype(jnp.float32)
    mask = (dvalid[:, None] * plane[None, :]).reshape(1, Ds * Lpad)

    wdw = params["wdw"][:, :, None]        # (K^3, C, 1)
    comp_params = pltpu.CompilerParams(
        dimension_semantics=("parallel", "parallel"),
        vmem_limit_bytes=vmem_req)

    # ---- pass 1: depthwise conv + GroupNorm partial sums + residual -----------------
    kernel1 = functools.partial(_pass1_dwconv_kernel, K, pad, Wp, Lpad, TD, C)
    h, xres, ps1, ps2 = pl.pallas_call(
        kernel1,
        out_shape=(
            jax.ShapeDtypeStruct((N, C, Ds * Lpad), jnp.float32),
            jax.ShapeDtypeStruct((N, C, Ds * Lpad), jnp.float32),
            jax.ShapeDtypeStruct((N, nTd, C, 1), jnp.float32),
            jax.ShapeDtypeStruct((N, nTd, C, 1), jnp.float32),
        ),
        grid_spec=pltpu.PrefetchScalarGridSpec(
            num_scalar_prefetch=0,
            grid=(N, nTd),
            in_specs=[
                pl.BlockSpec(memory_space=pl.ANY),                       # padded x (HBM)
                pl.BlockSpec((1, T), lambda n, t: (0, t)),               # validity mask
                pl.BlockSpec((K * K * K, C, 1), lambda n, t: (0, 0, 0)),  # depthwise taps
                pl.BlockSpec((C, 1), lambda n, t: (0, 0)),               # conv1 bias
            ],
            out_specs=(
                pl.BlockSpec((1, C, T), lambda n, t: (n, 0, t)),         # h
                pl.BlockSpec((1, C, T), lambda n, t: (n, 0, t)),         # residual x
                pl.BlockSpec((1, 1, C, 1), lambda n, t: (n, t, 0, 0)),   # sum(h)
                pl.BlockSpec((1, 1, C, 1), lambda n, t: (n, t, 0, 0)),   # sum(h^2)
            ),
            scratch_shapes=[pltpu.VMEM((C, Tin), jnp.float32),
                            pltpu.SemaphoreType.DMA],
        ),
        compiler_params=comp_params,
    )(xp, mask, wdw, params["bdw"])

    # exact GroupNorm statistics from the per-tile partial sums (tiny JAX glue)
    s1 = jnp.sum(ps1, axis=1)              # (N, C, 1)
    s2 = jnp.sum(ps2, axis=1)
    mu = s1 / S
    var = s2 / S - mu * mu
    inv = jax.lax.rsqrt(var + 1e-5)
    gscale = inv * params["gn_w"][None]
    gshift = params["gn_b"][None] - mu * gscale
    gn_par = jnp.concatenate([gscale, gshift], axis=-1)      # (N, C, 2)

    # ---- pass 2: GN + conv2 + GELU, GRN partial sum-of-squares ----------------------
    psq = pl.pallas_call(
        _pass2_grn_stats_kernel,
        out_shape=jax.ShapeDtypeStruct((N, nTd, E, 1), jnp.float32),
        grid_spec=pltpu.PrefetchScalarGridSpec(
            num_scalar_prefetch=0,
            grid=(N, nTd),
            in_specs=[
                pl.BlockSpec((1, C, T), lambda n, t: (n, 0, t)),         # h
                pl.BlockSpec((1, T), lambda n, t: (0, t)),               # validity mask
                pl.BlockSpec((1, C, 2), lambda n, t: (n, 0, 0)),         # GN scale/shift
                pl.BlockSpec((E, C), lambda n, t: (0, 0)),               # conv2 weight
                pl.BlockSpec((E, 1), lambda n, t: (0, 0)),               # conv2 bias
            ],
            out_specs=pl.BlockSpec((1, 1, E, 1), lambda n, t: (n, t, 0, 0)),
        ),
        compiler_params=comp_params,
    )(h, mask, gn_par, params["w2"], params["b2"])

    gx = jnp.sqrt(jnp.sum(psq, axis=1))                       # (N, E, 1) exact L2 norms
    gmean = jnp.mean(gx, axis=1, keepdims=True)
    grn_a = params["grn_gamma"][None] * (gx / (gmean + 1e-6)) + 1.0

    # ---- pass 3: GN + conv2 + GELU (recompute) + GRN + conv3 + residual -------------
    out = pl.pallas_call(
        _pass3_output_kernel,
        out_shape=jax.ShapeDtypeStruct((N, C, Ds * Lpad), jnp.float32),
        grid_spec=pltpu.PrefetchScalarGridSpec(
            num_scalar_prefetch=0,
            grid=(N, nTd),
            in_specs=[
                pl.BlockSpec((1, C, T), lambda n, t: (n, 0, t)),         # h
                pl.BlockSpec((1, C, T), lambda n, t: (n, 0, t)),         # residual x
                pl.BlockSpec((1, C, 2), lambda n, t: (n, 0, 0)),         # GN scale/shift
                pl.BlockSpec((E, C), lambda n, t: (0, 0)),               # conv2 weight
                pl.BlockSpec((E, 1), lambda n, t: (0, 0)),               # conv2 bias
                pl.BlockSpec((1, E, 1), lambda n, t: (n, 0, 0)),         # GRN scale
                pl.BlockSpec((E, 1), lambda n, t: (0, 0)),               # GRN beta
                pl.BlockSpec((C, E), lambda n, t: (0, 0)),               # conv3 weight
                pl.BlockSpec((C, 1), lambda n, t: (0, 0)),               # conv3 bias
            ],
            out_specs=pl.BlockSpec((1, C, T), lambda n, t: (n, 0, t)),
        ),
        compiler_params=comp_params,
    )(h, xres, gn_par, params["w2"], params["b2"],
      grn_a, params["grn_beta"], params["w3"], params["b3"])

    # drop padded-plane / padded-depth positions -> NCDHW
    out = out.reshape(N, C, Ds, Lpad)[:, :, :D, :L]
    out = out.reshape(N, C, D, Hp, Wp)[:, :, :, :H, :W]
    return out


# ---------------------------------------------------------------------------
# Deterministic parameter init (shapes from MedNeXtBlock.__init__, 3d, groups=channels)
# ---------------------------------------------------------------------------
def init_params(key, channels, exp_r, kernel_size):
    C, E, K = channels, exp_r * channels, kernel_size
    ks = jax.random.split(key, 10)
    return {
        "kernel_size": K,
        # conv1 depthwise: torch (C, 1, K, K, K) -> stored as (K^3, C), tap = (kd*K+kh)*K+kw
        "wdw": 0.2 * jax.random.normal(ks[0], (K * K * K, C), jnp.float32),
        "bdw": 0.1 * jax.random.normal(ks[1], (C, 1), jnp.float32),
        # GroupNorm affine params (per channel)
        "gn_w": 1.0 + 0.1 * jax.random.normal(ks[2], (C, 1), jnp.float32),
        "gn_b": 0.1 * jax.random.normal(ks[3], (C, 1), jnp.float32),
        # conv2: torch (E, C, 1, 1, 1) -> (E, C)
        "w2": 0.2 * jax.random.normal(ks[4], (E, C), jnp.float32),
        "b2": 0.1 * jax.random.normal(ks[5], (E, 1), jnp.float32),
        # GRN params (torch init is zeros; randomized here to exercise the path)
        "grn_gamma": 0.1 * jax.random.normal(ks[6], (E, 1), jnp.float32),
        "grn_beta": 0.1 * jax.random.normal(ks[7], (E, 1), jnp.float32),
        # conv3: torch (C, E, 1, 1, 1) -> (C, E)
        "w3": 0.2 * jax.random.normal(ks[8], (C, E), jnp.float32),
        "b3": 0.1 * jax.random.normal(ks[9], (C, 1), jnp.float32),
    }


# ---------------------------------------------------------------------------
# Pure-JAX reference (mirrors the PyTorch forward, f32 everywhere)
# ---------------------------------------------------------------------------
def mednext_block_reference(x, params):
    N, C, D, H, W = x.shape
    K = int(params["kernel_size"])
    pad = K // 2
    E = params["w2"].shape[0]
    hp = jax.lax.Precision.HIGHEST
    wdw = jnp.transpose(params["wdw"]).reshape(C, 1, K, K, K)
    y = jax.lax.conv_general_dilated(
        x, wdw, window_strides=(1, 1, 1), padding=[(pad, pad)] * 3,
        dimension_numbers=("NCDHW", "OIDHW", "NCDHW"),
        feature_group_count=C, precision=hp)
    y = y + params["bdw"].reshape(1, C, 1, 1, 1)
    mu = jnp.mean(y, axis=(2, 3, 4), keepdims=True)
    var = jnp.mean((y - mu) ** 2, axis=(2, 3, 4), keepdims=True)
    y = (y - mu) / jnp.sqrt(var + 1e-5)
    y = y * params["gn_w"].reshape(1, C, 1, 1, 1) + params["gn_b"].reshape(1, C, 1, 1, 1)
    y = jnp.einsum("ncdhw,ec->nedhw", y, params["w2"], precision=hp) \
        + params["b2"].reshape(1, E, 1, 1, 1)
    y = jax.nn.gelu(y, approximate=False)
    gx = jnp.sqrt(jnp.sum(y * y, axis=(2, 3, 4), keepdims=True))
    nx = gx / (jnp.mean(gx, axis=1, keepdims=True) + 1e-6)
    y = params["grn_gamma"].reshape(1, E, 1, 1, 1) * (y * nx) \
        + params["grn_beta"].reshape(1, E, 1, 1, 1) + y
    y = jnp.einsum("nedhw,ce->ncdhw", y, params["w3"], precision=hp) \
        + params["b3"].reshape(1, C, 1, 1, 1)
    return x + y


if __name__ == "__main__":
    key = jax.random.PRNGKey(0)
    k_x, k_p = jax.random.split(key)
    N, C, D, H, W = 2, 4, 8, 8, 8
    exp_r, kernel_size = 4, 3

    x = jax.random.normal(k_x, (N, C, D, H, W), jnp.float32)
    params = init_params(k_p, C, exp_r, kernel_size)

    # max_tile_planes=3 forces the spatially-tiled path (3 depth tiles, ragged last tile)
    out = jax.block_until_ready(mednext_block_forward(x, params, max_tile_planes=3))
    ref = jax.block_until_ready(mednext_block_reference(x, params))

    assert out.shape == x.shape and out.dtype == x.dtype
    max_err = float(jnp.max(jnp.abs(out - ref)))
    if not bool(jnp.allclose(out, ref, atol=2e-3, rtol=2e-3)):
        raise AssertionError(f"Pallas output mismatch vs reference, max abs err = {max_err}")
    print("KERNEL_OK")
</pallas_src>

<mosaic_0001>
module attributes {stable_mosaic.version = 11 : i64} {
  func.func @_pass1_dwconv_kernel(%arg0: i32, %arg1: i32, %arg2: memref<2x4x1408xf32, #tpu.memory_space<any>>, %arg3: memref<1x384xf32, #tpu.memory_space<vmem>>, %arg4: memref<27x4x1xf32, #tpu.memory_space<vmem>>, %arg5: memref<4x1xf32, #tpu.memory_space<vmem>>, %arg6: memref<1x4x384xf32, #tpu.memory_space<vmem>>, %arg7: memref<1x4x384xf32, #tpu.memory_space<vmem>>, %arg8: memref<1x1x4x1xf32, #tpu.memory_space<vmem>>, %arg9: memref<1x1x4x1xf32, #tpu.memory_space<vmem>>, %arg10: memref<4x640xf32, #tpu.memory_space<vmem>>, %arg11: memref<!tpu.dma_semaphore, #tpu.memory_space<semaphore_mem>>) attributes {dimension_semantics = [#tpu.dimension_semantics<parallel>, #tpu.dimension_semantics<parallel>], iteration_bounds = array<i64: 2, 3>, scalar_prefetch = 0 : i64, scratch_operands = 2 : i64, tpu.core_type = #tpu.core_type<tc>, window_params = [{}, {transform_indices = @transform_1, window_bounds = array<i64: 1, 384>}, {pipeline_mode = #tpu.pipeline_mode<synchronous>, transform_indices = @transform_2, window_bounds = array<i64: 27, 4, 1>}, {pipeline_mode = #tpu.pipeline_mode<synchronous>, transform_indices = @transform_3, window_bounds = array<i64: 4, 1>}, {transform_indices = @transform_4, window_bounds = array<i64: 1, 4, 384>}, {transform_indices = @transform_5, window_bounds = array<i64: 1, 4, 384>}, {transform_indices = @transform_6, window_bounds = array<i64: 1, 1, 4, 1>}, {transform_indices = @transform_7, window_bounds = array<i64: 1, 1, 4, 1>}]} {
    %c384_i32 = arith.constant 384 : i32
    %0 = arith.muli %arg1, %c384_i32 : i32
    %1 = tpu.assume_multiple %0, 128 : i32
    %c0_i32 = arith.constant 0 : i32
    %2 = tpu.memref_slice %arg2[%arg0, %c0_i32, %1] : memref<2x4x1408xf32, #tpu.memory_space<any>> -> memref<1x4x640xf32, #tpu.memory_space<any>>
    %3 = tpu.memref_squeeze %2 : memref<1x4x640xf32, #tpu.memory_space<any>> -> memref<4x640xf32, #tpu.memory_space<any>>
    tpu.enqueue_dma source(%3 : memref<4x640xf32, #tpu.memory_space<any>>) target(%arg10 : memref<4x640xf32, #tpu.memory_space<vmem>>) target_semaphore(%arg11 : memref<!tpu.dma_semaphore, #tpu.memory_space<semaphore_mem>>)
    %c0_i32_0 = arith.constant 0 : i32
    %4 = tpu.memref_slice %arg2[%arg0, %c0_i32_0, %1] : memref<2x4x1408xf32, #tpu.memory_space<any>> -> memref<1x4x640xf32, #tpu.memory_space<any>>
    %5 = tpu.memref_squeeze %4 : memref<1x4x640xf32, #tpu.memory_space<any>> -> memref<4x640xf32, #tpu.memory_space<any>>
    tpu.wait_dma2 semaphore(%arg11 : memref<!tpu.dma_semaphore, #tpu.memory_space<semaphore_mem>>) src(%5 : memref<4x640xf32, #tpu.memory_space<any>>) dst(%arg10 : memref<4x640xf32, #tpu.memory_space<vmem>>)
    %c0 = arith.constant 0 : index
    %c0_1 = arith.constant 0 : index
    %6 = vector.load %arg10[%c0, %c0_1] : memref<4x640xf32, #tpu.memory_space<vmem>>, vector<4x640xf32>
    %c0_2 = arith.constant 0 : index
    %c0_3 = arith.constant 0 : index
    %c0_4 = arith.constant 0 : index
    %7 = vector.load %arg4[%c0_2, %c0_3, %c0_4] : memref<27x4x1xf32, #tpu.memory_space<vmem>>, vector<27x4x1xf32>
    %c0_5 = arith.constant 0 : index
    %c0_6 = arith.constant 0 : index
    %8 = vector.load %arg3[%c0_5, %c0_6] : memref<1x384xf32, #tpu.memory_space<vmem>>, vector<1x384xf32>
    %cst = arith.constant 0.000000e+00 : f32
    %9 = vector.broadcast %cst : f32 to vector<4x384xf32>
    %10 = vector.extract_strided_slice %6 {offsets = [0, 0], sizes = [4, 384], strides = [1, 1]} : vector<4x640xf32> to vector<4x384xf32>
    %11 = vector.extract_strided_slice %7 {offsets = [0, 0, 0], sizes = [1, 4, 1], strides = [1, 1, 1]} : vector<27x4x1xf32> to vector<1x4x1xf32>
    %12 = vector.shape_cast %11 : vector<1x4x1xf32> to vector<4x1xf32>
    %13 = vector.broadcast %12 : vector<4x1xf32> to vector<4x384xf32>
    %14 = arith.mulf %10, %13 : vector<4x384xf32>
    %15 = arith.addf %9, %14 : vector<4x384xf32>
    %16 = vector.extract_strided_slice %6 {offsets = [0, 128], sizes = [4, 384], strides = [1, 1]} : vector<4x640xf32> to vector<4x384xf32>
    %17 = vector.extract_strided_slice %7 {offsets = [9, 0, 0], sizes = [1, 4, 1], strides = [1, 1, 1]} : vector<27x4x1xf32> to vector<1x4x1xf32>
    %18 = vector.shape_cast %17 : vector<1x4x1xf32> to vector<4x1xf32>
    %19 = vector.broadcast %18 : vector<4x1xf32> to vector<4x384xf32>
    %20 = arith.mulf %16, %19 : vector<4x384xf32>
    %21 = arith.addf %15, %20 : vector<4x384xf32>
    %22 = vector.extract_strided_slice %6 {offsets = [0, 256], sizes = [4, 384], strides = [1, 1]} : vector<4x640xf32> to vector<4x384xf32>
    %23 = vector.extract_strided_slice %7 {offsets = [18, 0, 0], sizes = [1, 4, 1], strides = [1, 1, 1]} : vector<27x4x1xf32> to vector<1x4x1xf32>
    %24 = vector.shape_cast %23 : vector<1x4x1xf32> to vector<4x1xf32>
    %25 = vector.broadcast %24 : vector<4x1xf32> to vector<4x384xf32>
    %26 = arith.mulf %22, %25 : vector<4x384xf32>
    %27 = arith.addf %21, %26 : vector<4x384xf32>
    %c639_i32 = arith.constant 639 : i32
    %28 = tpu.dynamic_rotate %6 by %c639_i32 dim 1 : vector<4x640xf32>, i32 -> vector<4x640xf32>
    %29 = vector.extract_strided_slice %28 {offsets = [0, 0], sizes = [4, 384], strides = [1, 1]} : vector<4x640xf32> to vector<4x384xf32>
    %30 = vector.extract_strided_slice %7 {offsets = [1, 0, 0], sizes = [1, 4, 1], strides = [1, 1, 1]} : vector<27x4x1xf32> to vector<1x4x1xf32>
    %31 = vector.shape_cast %30 : vector<1x4x1xf32> to vector<4x1xf32>
    %32 = vector.broadcast %31 : vector<4x1xf32> to vector<4x384xf32>
    %33 = arith.mulf %29, %32 : vector<4x384xf32>
    %34 = arith.addf %27, %33 : vector<4x384xf32>
    %35 = vector.extract_strided_slice %28 {offsets = [0, 128], sizes = [4, 384], strides = [1, 1]} : vector<4x640xf32> to vector<4x384xf32>
    %36 = vector.extract_strided_slice %7 {offsets = [10, 0, 0], sizes = [1, 4, 1], strides = [1, 1, 1]} : vector<27x4x1xf32> to vector<1x4x1xf32>
    %37 = vector.shape_cast %36 : vector<1x4x1xf32> to vector<4x1xf32>
    %38 = vector.broadcast %37 : vector<4x1xf32> to vector<4x384xf32>
    %39 = arith.mulf %35, %38 : vector<4x384xf32>
    %40 = arith.addf %34, %39 : vector<4x384xf32>
    %41 = vector.extract_strided_slice %28 {offsets = [0, 256], sizes = [4, 384], strides = [1, 1]} : vector<4x640xf32> to vector<4x384xf32>
    %42 = vector.extract_strided_slice %7 {offsets = [19, 0, 0], sizes = [1, 4, 1], strides = [1, 1, 1]} : vector<27x4x1xf32> to vector<1x4x1xf32>
    %43 = vector.shape_cast %42 : vector<1x4x1xf32> to vector<4x1xf32>
    %44 = vector.broadcast %43 : vector<4x1xf32> to vector<4x384xf32>
    %45 = arith.mulf %41, %44 : vector<4x384xf32>
    %46 = arith.addf %40, %45 : vector<4x384xf32>
    %c638_i32 = arith.constant 638 : i32
    %47 = tpu.dynamic_rotate %6 by %c638_i32 dim 1 : vector<4x640xf32>, i32 -> vector<4x640xf32>
    %48 = vector.extract_strided_slice %47 {offsets = [0, 0], sizes = [4, 384], strides = [1, 1]} : vector<4x640xf32> to vector<4x384xf32>
    %49 = vector.extract_strided_slice %7 {offsets = [2, 0, 0], sizes = [1, 4, 1], strides = [1, 1, 1]} : vector<27x4x1xf32> to vector<1x4x1xf32>
    %50 = vector.shape_cast %49 : vector<1x4x1xf32> to vector<4x1xf32>
    %51 = vector.broadcast %50 : vector<4x1xf32> to vector<4x384xf32>
    %52 = arith.mulf %48, %51 : vector<4x384xf32>
    %53 = arith.addf %46, %52 : vector<4x384xf32>
    %54 = vector.extract_strided_slice %47 {offsets = [0, 128], sizes = [4, 384], strides = [1, 1]} : vector<4x640xf32> to vector<4x384xf32>
    %55 = vector.extract_strided_slice %7 {offsets = [11, 0, 0], sizes = [1, 4, 1], strides = [1, 1, 1]} : vector<27x4x1xf32> to vector<1x4x1xf32>
    %56 = vector.shape_cast %55 : vector<1x4x1xf32> to vector<4x1xf32>
    %57 = vector.broadcast %56 : vector<4x1xf32> to vector<4x384xf32>
    %58 = arith.mulf %54, %57 : vector<4x384xf32>
    %59 = arith.addf %53, %58 : vector<4x384xf32>
    %60 = vector.extract_strided_slice %47 {offsets = [0, 256], sizes = [4, 384], strides = [1, 1]} : vector<4x640xf32> to vector<4x384xf32>
    %61 = vector.extract_strided_slice %7 {offsets = [20, 0, 0], sizes = [1, 4, 1], strides = [1, 1, 1]} : vector<27x4x1xf32> to vector<1x4x1xf32>
    %62 = vector.shape_cast %61 : vector<1x4x1xf32> to vector<4x1xf32>
    %63 = vector.broadcast %62 : vector<4x1xf32> to vector<4x384xf32>
    %64 = arith.mulf %60, %63 : vector<4x384xf32>
    %65 = arith.addf %59, %64 : vector<4x384xf32>
    %c630_i32 = arith.constant 630 : i32
    %66 = tpu.dynamic_rotate %6 by %c630_i32 dim 1 : vector<4x640xf32>, i32 -> vector<4x640xf32>
    %67 = vector.extract_strided_slice %66 {offsets = [0, 0], sizes = [4, 384], strides = [1, 1]} : vector<4x640xf32> to vector<4x384xf32>
    %68 = vector.extract_strided_slice %7 {offsets = [3, 0, 0], sizes = [1, 4, 1], strides = [1, 1, 1]} : vector<27x4x1xf32> to vector<1x4x1xf32>
    %69 = vector.shape_cast %68 : vector<1x4x1xf32> to vector<4x1xf32>
    %70 = vector.broadcast %69 : vector<4x1xf32> to vector<4x384xf32>
    %71 = arith.mulf %67, %70 : vector<4x384xf32>
    %72 = arith.addf %65, %71 : vector<4x384xf32>
    %73 = vector.extract_strided_slice %66 {offsets = [0, 128], sizes = [4, 384], strides = [1, 1]} : vector<4x640xf32> to vector<4x384xf32>
    %74 = vector.extract_strided_slice %7 {offsets = [12, 0, 0], sizes = [1, 4, 1], strides = [1, 1, 1]} : vector<27x4x1xf32> to vector<1x4x1xf32>
    %75 = vector.shape_cast %74 : vector<1x4x1xf32> to vector<4x1xf32>
    %76 = vector.broadcast %75 : vector<4x1xf32> to vector<4x384xf32>
    %77 = arith.mulf %73, %76 : vector<4x384xf32>
    %78 = arith.addf %72, %77 : vector<4x384xf32>
    %79 = vector.extract_strided_slice %66 {offsets = [0, 256], sizes = [4, 384], strides = [1, 1]} : vector<4x640xf32> to vector<4x384xf32>
    %80 = vector.extract_strided_slice %7 {offsets = [21, 0, 0], sizes = [1, 4, 1], strides = [1, 1, 1]} : vector<27x4x1xf32> to vector<1x4x1xf32>
    %81 = vector.shape_cast %80 : vector<1x4x1xf32> to vector<4x1xf32>
    %82 = vector.broadcast %81 : vector<4x1xf32> to vector<4x384xf32>
    %83 = arith.mulf %79, %82 : vector<4x384xf32>
    %84 = arith.addf %78, %83 : vector<4x384xf32>
    %c629_i32 = arith.constant 629 : i32
    %85 = tpu.dynamic_rotate %6 by %c629_i32 dim 1 : vector<4x640xf32>, i32 -> vector<4x640xf32>
    %86 = vector.extract_strided_slice %85 {offsets = [0, 128], sizes = [4, 384], strides = [1, 1]} : vector<4x640xf32> to vector<4x384xf32>
    %87 = vector.extract_strided_slice %85 {offsets = [0, 0], sizes = [4, 384], strides = [1, 1]} : vector<4x640xf32> to vector<4x384xf32>
    %88 = vector.extract_strided_slice %7 {offsets = [4, 0, 0], sizes = [1, 4, 1], strides = [1, 1, 1]} : vector<27x4x1xf32> to vector<1x4x1xf32>
    %89 = vector.shape_cast %88 : vector<1x4x1xf32> to vector<4x1xf32>
    %90 = vector.broadcast %89 : vector<4x1xf32> to vector<4x384xf32>
    %91 = arith.mulf %87, %90 : vector<4x384xf32>
    %92 = arith.addf %84, %91 : vector<4x384xf32>
    %93 = vector.extract_strided_slice %85 {offsets = [0, 128], sizes = [4, 384], strides = [1, 1]} : vector<4x640xf32> to vector<4x384xf32>
    %94 = vector.extract_strided_slice %7 {offsets = [13, 0, 0], sizes = [1, 4, 1], strides = [1, 1, 1]} : vector<27x4x1xf32> to vector<1x4x1xf32>
    %95 = vector.shape_cast %94 : vector<1x4x1xf32> to vector<4x1xf32>
    %96 = vector.broadcast %95 : vector<4x1xf32> to vector<4x384xf32>
    %97 = arith.mulf %93, %96 : vector<4x384xf32>
    %98 = arith.addf %92, %97 : vector<4x384xf32>
    %99 = vector.extract_strided_slice %85 {offsets = [0, 256], sizes = [4, 384], strides = [1, 1]} : vector<4x640xf32> to vector<4x384xf32>
    %100 = vector.extract_strided_slice %7 {offsets = [22, 0, 0], sizes = [1, 4, 1], strides = [1, 1, 1]} : vector<27x4x1xf32> to vector<1x4x1xf32>
    %101 = vector.shape_cast %100 : vector<1x4x1xf32> to vector<4x1xf32>
    %102 = vector.broadcast %101 : vector<4x1xf32> to vector<4x384xf32>
    %103 = arith.mulf %99, %102 : vector<4x384xf32>
    %104 = arith.addf %98, %103 : vector<4x384xf32>
    %c628_i32 = arith.constant 628 : i32
    %105 = tpu.dynamic_rotate %6 by %c628_i32 dim 1 : vector<4x640xf32>, i32 -> vector<4x640xf32>
    %106 = vector.extract_strided_slice %105 {offsets = [0, 0], sizes = [4, 384], strides = [1, 1]} : vector<4x640xf32> to vector<4x384xf32>
    %107 = vector.extract_strided_slice %7 {offsets = [5, 0, 0], sizes = [1, 4, 1], strides = [1, 1, 1]} : vector<27x4x1xf32> to vector<1x4x1xf32>
    %108 = vector.shape_cast %107 : vector<1x4x1xf32> to vector<4x1xf32>
    %109 = vector.broadcast %108 : vector<4x1xf32> to vector<4x384xf32>
    %110 = arith.mulf %106, %109 : vector<4x384xf32>
    %111 = arith.addf %104, %110 : vector<4x384xf32>
    %112 = vector.extract_strided_slice %105 {offsets = [0, 128], sizes = [4, 384], strides = [1, 1]} : vector<4x640xf32> to vector<4x384xf32>
    %113 = vector.extract_strided_slice %7 {offsets = [14, 0, 0], sizes = [1, 4, 1], strides = [1, 1, 1]} : vector<27x4x1xf32> to vector<1x4x1xf32>
    %114 = vector.shape_cast %113 : vector<1x4x1xf32> to vector<4x1xf32>
    %115 = vector.broadcast %114 : vector<4x1xf32> to vector<4x384xf32>
    %116 = arith.mulf %112, %115 : vector<4x384xf32>
    %117 = arith.addf %111, %116 : vector<4x384xf32>
    %118 = vector.extract_strided_slice %105 {offsets = [0, 256], sizes = [4, 384], strides = [1, 1]} : vector<4x640xf32> to vector<4x384xf32>
    %119 = vector.extract_strided_slice %7 {offsets = [23, 0, 0], sizes = [1, 4, 1], strides = [1, 1, 1]} : vector<27x4x1xf32> to vector<1x4x1xf32>
    %120 = vector.shape_cast %119 : vector<1x4x1xf32> to vector<4x1xf32>
    %121 = vector.broadcast %120 : vector<4x1xf32> to vector<4x384xf32>
    %122 = arith.mulf %118, %121 : vector<4x384xf32>
    %123 = arith.addf %117, %122 : vector<4x384xf32>
    %c620_i32 = arith.constant 620 : i32
    %124 = tpu.dynamic_rotate %6 by %c620_i32 dim 1 : vector<4x640xf32>, i32 -> vector<4x640xf32>
    %125 = vector.extract_strided_slice %124 {offsets = [0, 0], sizes = [4, 384], strides = [1, 1]} : vector<4x640xf32> to vector<4x384xf32>
    %126 = vector.extract_strided_slice %7 {offsets = [6, 0, 0], sizes = [1, 4, 1], strides = [1, 1, 1]} : vector<27x4x1xf32> to vector<1x4x1xf32>
    %127 = vector.shape_cast %126 : vector<1x4x1xf32> to vector<4x1xf32>
    %128 = vector.broadcast %127 : vector<4x1xf32> to vector<4x384xf32>
    %129 = arith.mulf %125, %128 : vector<4x384xf32>
    %130 = arith.addf %123, %129 : vector<4x384xf32>
    %131 = vector.extract_strided_slice %124 {offsets = [0, 128], sizes = [4, 384], strides = [1, 1]} : vector<4x640xf32> to vector<4x384xf32>
    %132 = vector.extract_strided_slice %7 {offsets = [15, 0, 0], sizes = [1, 4, 1], strides = [1, 1, 1]} : vector<27x4x1xf32> to vector<1x4x1xf32>
    %133 = vector.shape_cast %132 : vector<1x4x1xf32> to vector<4x1xf32>
    %134 = vector.broadcast %133 : vector<4x1xf32> to vector<4x384xf32>
    %135 = arith.mulf %131, %134 : vector<4x384xf32>
    %136 = arith.addf %130, %135 : vector<4x384xf32>
    %137 = vector.extract_strided_slice %124 {offsets = [0, 256], sizes = [4, 384], strides = [1, 1]} : vector<4x640xf32> to vector<4x384xf32>
    %138 = vector.extract_strided_slice %7 {offsets = [24, 0, 0], sizes = [1, 4, 1], strides = [1, 1, 1]} : vector<27x4x1xf32> to vector<1x4x1xf32>
    %139 = vector.shape_cast %138 : vector<1x4x1xf32> to vector<4x1xf32>
    %140 = vector.broadcast %139 : vector<4x1xf32> to vector<4x384xf32>
    %141 = arith.mulf %137, %140 : vector<4x384xf32>
    %142 = arith.addf %136, %141 : vector<4x384xf32>
    %c619_i32 = arith.constant 619 : i32
    %143 = tpu.dynamic_rotate %6 by %c619_i32 dim 1 : vector<4x640xf32>, i32 -> vector<4x640xf32>
    %144 = vector.extract_strided_slice %143 {offsets = [0, 0], sizes = [4, 384], strides = [1, 1]} : vector<4x640xf32> to vector<4x384xf32>
    %145 = vector.extract_strided_slice %7 {offsets = [7, 0, 0], sizes = [1, 4, 1], strides = [1, 1, 1]} : vector<27x4x1xf32> to vector<1x4x1xf32>
    %146 = vector.shape_cast %145 : vector<1x4x1xf32> to vector<4x1xf32>
    %147 = vector.broadcast %146 : vector<4x1xf32> to vector<4x384xf32>
    %148 = arith.mulf %144, %147 : vector<4x384xf32>
    %149 = arith.addf %142, %148 : vector<4x384xf32>
    %150 = vector.extract_strided_slice %143 {offsets = [0, 128], sizes = [4, 384], strides = [1, 1]} : vector<4x640xf32> to vector<4x384xf32>
    %151 = vector.extract_strided_slice %7 {offsets = [16, 0, 0], sizes = [1, 4, 1], strides = [1, 1, 1]} : vector<27x4x1xf32> to vector<1x4x1xf32>
    %152 = vector.shape_cast %151 : vector<1x4x1xf32> to vector<4x1xf32>
    %153 = vector.broadcast %152 : vector<4x1xf32> to vector<4x384xf32>
    %154 = arith.mulf %150, %153 : vector<4x384xf32>
    %155 = arith.addf %149, %154 : vector<4x384xf32>
    %156 = vector.extract_strided_slice %143 {offsets = [0, 256], sizes = [4, 384], strides = [1, 1]} : vector<4x640xf32> to vector<4x384xf32>
    %157 = vector.extract_strided_slice %7 {offsets = [25, 0, 0], sizes = [1, 4, 1], strides = [1, 1, 1]} : vector<27x4x1xf32> to vector<1x4x1xf32>
    %158 = vector.shape_cast %157 : vector<1x4x1xf32> to vector<4x1xf32>
    %159 = vector.broadcast %158 : vector<4x1xf32> to vector<4x384xf32>
    %160 = arith.mulf %156, %159 : vector<4x384xf32>
    %161 = arith.addf %155, %160 : vector<4x384xf32>
    %c618_i32 = arith.constant 618 : i32
    %162 = tpu.dynamic_rotate %6 by %c618_i32 dim 1 : vector<4x640xf32>, i32 -> vector<4x640xf32>
    %163 = vector.extract_strided_slice %162 {offsets = [0, 0], sizes = [4, 384], strides = [1, 1]} : vector<4x640xf32> to vector<4x384xf32>
    %164 = vector.extract_strided_slice %7 {offsets = [8, 0, 0], sizes = [1, 4, 1], strides = [1, 1, 1]} : vector<27x4x1xf32> to vector<1x4x1xf32>
    %165 = vector.shape_cast %164 : vector<1x4x1xf32> to vector<4x1xf32>
    %166 = vector.broadcast %165 : vector<4x1xf32> to vector<4x384xf32>
    %167 = arith.mulf %163, %166 : vector<4x384xf32>
    %168 = arith.addf %161, %167 : vector<4x384xf32>
    %169 = vector.extract_strided_slice %162 {offsets = [0, 128], sizes = [4, 384], strides = [1, 1]} : vector<4x640xf32> to vector<4x384xf32>
    %170 = vector.extract_strided_slice %7 {offsets = [17, 0, 0], sizes = [1, 4, 1], strides = [1, 1, 1]} : vector<27x4x1xf32> to vector<1x4x1xf32>
    %171 = vector.shape_cast %170 : vector<1x4x1xf32> to vector<4x1xf32>
    %172 = vector.broadcast %171 : vector<4x1xf32> to vector<4x384xf32>
    %173 = arith.mulf %169, %172 : vector<4x384xf32>
    %174 = arith.addf %168, %173 : vector<4x384xf32>
    %175 = vector.extract_strided_slice %162 {offsets = [0, 256], sizes = [4, 384], strides = [1, 1]} : vector<4x640xf32> to vector<4x384xf32>
    %176 = vector.extract_strided_slice %7 {offsets = [26, 0, 0], sizes = [1, 4, 1], strides = [1, 1, 1]} : vector<27x4x1xf32> to vector<1x4x1xf32>
    %177 = vector.shape_cast %176 : vector<1x4x1xf32> to vector<4x1xf32>
    %178 = vector.broadcast %177 : vector<4x1xf32> to vector<4x384xf32>
    %179 = arith.mulf %175, %178 : vector<4x384xf32>
    %180 = arith.addf %174, %179 : vector<4x384xf32>
    %c0_7 = arith.constant 0 : index
    %c0_8 = arith.constant 0 : index
    %181 = vector.load %arg5[%c0_7, %c0_8] : memref<4x1xf32, #tpu.memory_space<vmem>>, vector<4x1xf32>
    %182 = vector.broadcast %181 : vector<4x1xf32> to vector<4x384xf32>
    %183 = arith.addf %180, %182 : vector<4x384xf32>
    %184 = vector.broadcast %8 : vector<1x384xf32> to vector<4x384xf32>
    %185 = arith.mulf %183, %184 : vector<4x384xf32>
    %c0_9 = arith.constant 0 : index
    %c0_10 = arith.constant 0 : index
    %c0_11 = arith.constant 0 : index
    %186 = vector.load %arg6[%c0_9, %c0_10, %c0_11] : memref<1x4x384xf32, #tpu.memory_space<vmem>>, vector<1x4x384xf32>
    %187 = vector.shape_cast %186 : vector<1x4x384xf32> to vector<4x384xf32>
    %188 = vector.shape_cast %185 : vector<4x384xf32> to vector<1x4x384xf32>
    tpu.vector_store %arg6[%c0_9, %c0_10, %c0_11], %188 {strides = array<i32>} : memref<1x4x384xf32, #tpu.memory_space<vmem>>, vector<1x4x384xf32>,
    %c0_12 = arith.constant 0 : index
    %c0_13 = arith.constant 0 : index
    %c0_14 = arith.constant 0 : index
    %189 = vector.load %arg7[%c0_12, %c0_13, %c0_14] : memref<1x4x384xf32, #tpu.memory_space<vmem>>, vector<1x4x384xf32>
    %190 = vector.shape_cast %189 : vector<1x4x384xf32> to vector<4x384xf32>
    %191 = vector.shape_cast %86 : vector<4x384xf32> to vector<1x4x384xf32>
    tpu.vector_store %arg7[%c0_12, %c0_13, %c0_14], %191 {strides = array<i32>} : memref<1x4x384xf32, #tpu.memory_space<vmem>>, vector<1x4x384xf32>,
    %cst_15 = arith.constant dense<0.000000e+00> : vector<4xf32>
    %192 = vector.multi_reduction <add>, %185, %cst_15 [1] : vector<4x384xf32> to vector<4xf32>
    %193 = vector.shape_cast %192 : vector<4xf32> to vector<4x1xf32>
    %c0_16 = arith.constant 0 : index
    %c0_17 = arith.constant 0 : index
    %c0_18 = arith.constant 0 : index
    %c0_19 = arith.constant 0 : index
    %194 = vector.load %arg8[%c0_16, %c0_17, %c0_18, %c0_19] : memref<1x1x4x1xf32, #tpu.memory_space<vmem>>, vector<1x1x4x1xf32>
    %195 = vector.shape_cast %194 : vector<1x1x4x1xf32> to vector<4x1xf32>
    %196 = vector.shape_cast %193 : vector<4x1xf32> to vector<1x1x4x1xf32>
    tpu.vector_store %arg8[%c0_16, %c0_17, %c0_18, %c0_19], %196 {strides = array<i32>} : memref<1x1x4x1xf32, #tpu.memory_space<vmem>>, vector<1x1x4x1xf32>,
    %197 = arith.mulf %185, %185 : vector<4x384xf32>
    %cst_20 = arith.constant dense<0.000000e+00> : vector<4xf32>
    %198 = vector.multi_reduction <add>, %197, %cst_20 [1] : vector<4x384xf32> to vector<4xf32>
    %199 = vector.shape_cast %198 : vector<4xf32> to vector<4x1xf32>
    %c0_21 = arith.constant 0 : index
    %c0_22 = arith.constant 0 : index
    %c0_23 = arith.constant 0 : index
    %c0_24 = arith.constant 0 : index
    %200 = vector.load %arg9[%c0_21, %c0_22, %c0_23, %c0_24] : memref<1x1x4x1xf32, #tpu.memory_space<vmem>>, vector<1x1x4x1xf32>
    %201 = vector.shape_cast %200 : vector<1x1x4x1xf32> to vector<4x1xf32>
    %202 = vector.shape_cast %199 : vector<4x1xf32> to vector<1x1x4x1xf32>
    tpu.vector_store %arg9[%c0_21, %c0_22, %c0_23, %c0_24], %202 {strides = array<i32>} : memref<1x1x4x1xf32, #tpu.memory_space<vmem>>, vector<1x1x4x1xf32>,
    return
  }
  func.func @transform_1(%arg0: i32, %arg1: i32) -> (i32, i32) {
    %c0_i32 = arith.constant 0 : i32
    %c0_i32_0 = arith.constant 0 : i32
    return %c0_i32, %arg1 : i32, i32
  }
  func.func @transform_2(%arg0: i32, %arg1: i32) -> (i32, i32, i32) {
    %c0_i32 = arith.constant 0 : i32
    %c0_i32_0 = arith.constant 0 : i32
    %c0_i32_1 = arith.constant 0 : i32
    %c0_i32_2 = arith.constant 0 : i32
    return %c0_i32, %c0_i32_0, %c0_i32_1 : i32, i32, i32
  }
  func.func @transform_3(%arg0: i32, %arg1: i32) -> (i32, i32) {
    %c0_i32 = arith.constant 0 : i32
    %c0_i32_0 = arith.constant 0 : i32
    %c0_i32_1 = arith.constant 0 : i32
    return %c0_i32, %c0_i32_0 : i32, i32
  }
  func.func @transform_4(%arg0: i32, %arg1: i32) -> (i32, i32, i32) {
    %c0_i32 = arith.constant 0 : i32
    %c0_i32_0 = arith.constant 0 : i32
    return %arg0, %c0_i32, %arg1 : i32, i32, i32
  }
  func.func @transform_5(%arg0: i32, %arg1: i32) -> (i32, i32, i32) {
    %c0_i32 = arith.constant 0 : i32
    %c0_i32_0 = arith.constant 0 : i32
    return %arg0, %c0_i32, %arg1 : i32, i32, i32
  }
  func.func @transform_6(%arg0: i32, %arg1: i32) -> (i32, i32, i32, i32) {
    %c0_i32 = arith.constant 0 : i32
    %c0_i32_0 = arith.constant 0 : i32
    %c0_i32_1 = arith.constant 0 : i32
    return %arg0, %arg1, %c0_i32, %c0_i32_0 : i32, i32, i32, i32
  }
  func.func @transform_7(%arg0: i32, %arg1: i32) -> (i32, i32, i32, i32) {
    %c0_i32 = arith.constant 0 : i32
    %c0_i32_0 = arith.constant 0 : i32
    %c0_i32_1 = arith.constant 0 : i32
    return %arg0, %arg1, %c0_i32, %c0_i32_0 : i32, i32, i32, i32
  }
}

</mosaic_0001>

<llo_original>
// kernel: tpu_custom_call.1
$region0: #{tpu_custom_call.1}
  #allocation0 [shape = 'u32[]', space=smem, size = 0x4, offset = 0x4, fixed_abs, tag = 'smem constant byte address 0x4 - core index']
  #allocation1 [shape = 'u32[72,128]{1,0:T(1,128)}', space=vmem, size = 0x9000, scoped, tag = 'internal scratch']
  #allocation2 [shape = 'f32[4,640]{1,0:T(4,128)}', space=vmem, size = 0x2800, scoped, tag = 'scratch operand']
  #allocation3 [shape = 's32[1]{0}', space=sflag, size = 0x4, scoped, tag = 'scratch operand']
  #allocation8 [shape = 's32[]', space=sflag, size = 0x4, offset = 0, fixed_abs, tag = 'sflag constant byte address 0x0 - dummy sync flag']
  %s0 = inlined_call_operand.vmem [shape: f32[2,4,1408], index: 0, kind: input, shape index: {}]
  %s1 = inlined_call_operand.vmem [shape: f32[1,1152], index: 1, kind: input, shape index: {}]
  %s2 = inlined_call_operand.vmem [shape: f32[27,4,1], index: 2, kind: input, shape index: {}]
  %s3 = inlined_call_operand.vmem [shape: f32[4,1], index: 3, kind: input, shape index: {}]
  %s4 = inlined_call_operand.hbm [shape: f32[2,4,1152], index: 4, kind: output, shape index: {0}]
  %s5 = inlined_call_operand.hbm [shape: f32[2,4,1152], index: 5, kind: output, shape index: {1}]
  %s6 = inlined_call_operand.vmem [shape: f32[2,3,4,1], index: 6, kind: output, shape index: {2}]
  %s7 = inlined_call_operand.vmem [shape: f32[2,3,4,1], index: 7, kind: output, shape index: {3}]
  %8 = xla_tuple %s4, %s5, %s6, %s7
  %s9 = sld [smem:[#allocation0]]
  $region91: #{tpu_custom_call.1} parent=0
    _
  %s11 = ssub.s32 1, %s9
  %s12 = scalar_select 0, %s11, %s9
  $region1: #{tpu_custom_call.1} parent=0
    #allocation4 [shape = 'u8[12288]{0}', space=vmem, size = 0x3000, scoped, tag = 'output window, operand 0']
    #allocation5 [shape = 's32[2]{0}', space=sflag, size = 0x8, scoped, tag = 'scoped memory for tpu_custom_call.1']
    #allocation6 [shape = 'u8[12288]{0}', space=vmem, size = 0x3000, scoped, tag = 'output window, operand 1']
    #allocation7 [shape = 's32[2]{0}', space=sflag, size = 0x8, scoped, tag = 'scoped memory for tpu_custom_call.1']
    %13 = vsyncpa [#allocation5], 0
    %s14 = scalar_lea.sflag [#allocation5], 1
    %15 = vsyncpa %s14, 0
    %16 = vsyncpa [#allocation7], 0
    %s17 = scalar_lea.sflag [#allocation7], 1
    %18 = vsyncpa %s17, 0
    loop: start=0, step=1, limit=8
    $region2: #{tpu_custom_call.1} parent=1 // loop_pre_header
      _
    $region3: #{tpu_custom_call.1} parent=1 // loop_header
      %s20 = sphi 0, %s24
      %p21 = scmp.ge.s32.totalorder %s20, 8
      %s27 = sphi 0, %s39
      %s28 = sphi 0, %s35
      %s29 = sphi 0, %s27
      %s30 = sphi 0, %s28
      %s31 = sphi 0, %s29
      %s32 = sphi 0, %s30
      %s42 = sphi 0, %s44
      %s45 = sphi 0, %s42
      %s46 = sphi 0, %s45
      %s62 = sphi 0, %s46
      %s66 = sphi 0, %s66
      %s68 = sphi 0, %s66
      %s69 = sphi 0, %s68
      %s83 = sphi 0, %s69
      %s87 = sphi 0, %s87
      %s89 = sphi 0, %s87
      %s90 = sphi 0, %s89
      %s104 = sphi 0, %s90
      %s112 = sphi 0, %s114
      %s115 = sphi 0, %s112
      %s116 = sphi 0, %s115
      %s132 = sphi 0, %s116
      %s140 = sphi 0, %s142
      %s143 = sphi 0, %s140
      %s144 = sphi 0, %s143
      %s160 = sphi 0, %s144
      %s168 = sphi 0, %s170
      %s171 = sphi 0, %s168
      %s172 = sphi 0, %s171
      %s188 = sphi 0, %s172
      %s196 = sphi 0, %s198
      %s199 = sphi 0, %s196
      %s200 = sphi 0, %s199
      %s216 = sphi 0, %s200
    $region4: #{tpu_custom_call.1} parent=1 // loop_header_branch
      %23 = sbr.rel (%p21) target = $region8
    $region5: #{tpu_custom_call.1} parent=1 // loop_body
      %s25 = ssub.s32 %s20, 1
      %s26 = ssub.s32 %s20, 2
      %s33 = sadd.s32 1, %s28
      %p34 = scmp.ge.s32.totalorder %s33, 3
      %s35 = scalar_select %p34, 0, %s33
      %s36 = sadd.s32 1, %s27
      %s37 = scalar_select %p34, %s36, %s27
      %p38 = scmp.ge.s32.totalorder %s37, 2
      %s39 = scalar_select %p38, 0, %s37
      %s40 = ssub.s32 %s28, %s35
      %p41 = scmp.eq.s32.totalorder %s40, 0
      %s43 = sadd.s32 %s42, 1
      %s44 = scalar_select %p41, %s42, %s43
      %p47 = pneg %p41
      %p48 = scmp.eq.s32.totalorder %s20, 5
      %p49 = por %p47, %p48
      %p50 = scmp.ne.s32.totalorder %s42, %s45
      %p51 = scmp.eq.s32.totalorder %s20, 0
      %p52 = por %p50, %p51
      %p53 = scmp.ne.s32.totalorder %s42, %s45
      %p54 = scmp.eq.s32.totalorder %s25, 5
      %p55 = por %p53, %p54
      %p56 = scmp.ne.s32.totalorder %s45, %s46
      %p57 = scmp.eq.s32.totalorder %s25, 0
      %p58 = por %p56, %p57
      %p59 = scmp.ne.s32.totalorder %s45, %s46
      %p60 = scmp.eq.s32.totalorder %s26, 5
      %p61 = por %p59, %p60
      %p63 = scmp.ne.s32.totalorder %s46, %s62
      %p64 = scmp.eq.s32.totalorder %s26, 0
      %p65 = por %p63, %p64
      %s67 = sadd.s32 %s66, 1
      %p70 = scmp.eq.s32.totalorder %s20, 5
      %p71 = scmp.ne.s32.totalorder %s66, %s68
      %p72 = scmp.eq.s32.totalorder %s20, 0
      %p73 = por %p71, %p72
      %p74 = scmp.ne.s32.totalorder %s66, %s68
      %p75 = scmp.eq.s32.totalorder %s25, 5
      %p76 = por %p74, %p75
      %p77 = scmp.ne.s32.totalorder %s68, %s69
      %p78 = scmp.eq.s32.totalorder %s25, 0
      %p79 = por %p77, %p78
      %p80 = scmp.ne.s32.totalorder %s68, %s69
      %p81 = scmp.eq.s32.totalorder %s26, 5
      %p82 = por %p80, %p81
      %p84 = scmp.ne.s32.totalorder %s69, %s83
      %p85 = scmp.eq.s32.totalorder %s26, 0
      %p86 = por %p84, %p85
      %s88 = sadd.s32 %s87, 1
      %p91 = scmp.eq.s32.totalorder %s20, 5
      %p92 = scmp.ne.s32.totalorder %s87, %s89
      %p93 = scmp.eq.s32.totalorder %s20, 0
      %p94 = por %p92, %p93
      %p95 = scmp.ne.s32.totalorder %s87, %s89
      %p96 = scmp.eq.s32.totalorder %s25, 5
      %p97 = por %p95, %p96
      %p98 = scmp.ne.s32.totalorder %s89, %s90
      %p99 = scmp.eq.s32.totalorder %s25, 0
      %p100 = por %p98, %p99
      %p101 = scmp.ne.s32.totalorder %s89, %s90
      %p102 = scmp.eq.s32.totalorder %s26, 5
      %p103 = por %p101, %p102
      %p105 = scmp.ne.s32.totalorder %s90, %s104
      %p106 = scmp.eq.s32.totalorder %s26, 0
      %p107 = por %p105, %p106
      %s108 = ssub.s32 %s27, %s39
      %s109 = ssub.s32 %s28, %s35
      %s110 = sor.u32 %s108, %s109
      %p111 = scmp.eq.s32.totalorder %s110, 0
      %s113 = sadd.s32 %s112, 1
      %s114 = scalar_select %p111, %s112, %s113
      %p117 = pneg %p111
      %p118 = scmp.eq.s32.totalorder %s20, 5
      %p119 = por %p117, %p118
      %p120 = scmp.ne.s32.totalorder %s112, %s115
      %p121 = scmp.eq.s32.totalorder %s20, 0
      %p122 = por %p120, %p121
      %p123 = scmp.ne.s32.totalorder %s112, %s115
      %p124 = scmp.eq.s32.totalorder %s25, 5
      %p125 = por %p123, %p124
      %p126 = scmp.ne.s32.totalorder %s115, %s116
      %p127 = scmp.eq.s32.totalorder %s25, 0
      %p128 = por %p126, %p127
      %p129 = scmp.ne.s32.totalorder %s115, %s116
      %p130 = scmp.eq.s32.totalorder %s26, 5
      %p131 = por %p129, %p130
      %p133 = scmp.ne.s32.totalorder %s116, %s132
      %p134 = scmp.eq.s32.totalorder %s26, 0
      %p135 = por %p133, %p134
      %s136 = ssub.s32 %s27, %s39
      %s137 = ssub.s32 %s28, %s35
      %s138 = sor.u32 %s136, %s137
      %p139 = scmp.eq.s32.totalorder %s138, 0
      %s141 = sadd.s32 %s140, 1
      %s142 = scalar_select %p139, %s140, %s141
      %p145 = pneg %p139
      %p146 = scmp.eq.s32.totalorder %s20, 5
      %p147 = por %p145, %p146
      %p148 = scmp.ne.s32.totalorder %s140, %s143
      %p149 = scmp.eq.s32.totalorder %s20, 0
      %p150 = por %p148, %p149
      %p151 = scmp.ne.s32.totalorder %s140, %s143
      %p152 = scmp.eq.s32.totalorder %s25, 5
      %p153 = por %p151, %p152
      %p154 = scmp.ne.s32.totalorder %s143, %s144
      %p155 = scmp.eq.s32.totalorder %s25, 0
      %p156 = por %p154, %p155
      %p157 = scmp.ne.s32.totalorder %s143, %s144
      %p158 = scmp.eq.s32.totalorder %s26, 5
      %p159 = por %p157, %p158
      %p161 = scmp.ne.s32.totalorder %s144, %s160
      %p162 = scmp.eq.s32.totalorder %s26, 0
      %p163 = por %p161, %p162
      %s164 = ssub.s32 %s27, %s39
      %s165 = ssub.s32 %s28, %s35
      %s166 = sor.u32 %s164, %s165
      %p167 = scmp.eq.s32.totalorder %s166, 0
      %s169 = sadd.s32 %s168, 1
      %s170 = scalar_select %p167, %s168, %s169
      %p173 = pneg %p167
      %p174 = scmp.eq.s32.totalorder %s20, 5
      %p175 = por %p173, %p174
      %p176 = scmp.ne.s32.totalorder %s168, %s171
      %p177 = scmp.eq.s32.totalorder %s20, 0
      %p178 = por %p176, %p177
      %p179 = scmp.ne.s32.totalorder %s168, %s171
      %p180 = scmp.eq.s32.totalorder %s25, 5
      %p181 = por %p179, %p180
      %p182 = scmp.ne.s32.totalorder %s171, %s172
      %p183 = scmp.eq.s32.totalorder %s25, 0
      %p184 = por %p182, %p183
      %p185 = scmp.ne.s32.totalorder %s171, %s172
      %p186 = scmp.eq.s32.totalorder %s26, 5
      %p187 = por %p185, %p186
      %p189 = scmp.ne.s32.totalorder %s172, %s188
      %p190 = scmp.eq.s32.totalorder %s26, 0
      %p191 = por %p189, %p190
      %s192 = ssub.s32 %s27, %s39
      %s193 = ssub.s32 %s28, %s35
      %s194 = sor.u32 %s192, %s193
      %p195 = scmp.eq.s32.totalorder %s194, 0
      %s197 = sadd.s32 %s196, 1
      %s198 = scalar_select %p195, %s196, %s197
      %p201 = pneg %p195
      %p202 = scmp.eq.s32.totalorder %s20, 5
      %p203 = por %p201, %p202
      %p204 = scmp.ne.s32.totalorder %s196, %s199
      %p205 = scmp.eq.s32.totalorder %s20, 0
      %p206 = por %p204, %p205
      %p207 = scmp.ne.s32.totalorder %s196, %s199
      %p208 = scmp.eq.s32.totalorder %s25, 5
      %p209 = por %p207, %p208
      %p210 = scmp.ne.s32.totalorder %s199, %s200
      %p211 = scmp.eq.s32.totalorder %s25, 0
      %p212 = por %p210, %p211
      %p213 = scmp.ne.s32.totalorder %s199, %s200
      %p214 = scmp.eq.s32.totalorder %s26, 5
      %p215 = por %p213, %p214
      %p217 = scmp.ne.s32.totalorder %s200, %s216
      %p218 = scmp.eq.s32.totalorder %s26, 0
      %p219 = por %p217, %p218
      %p220 = scmp.le.s32.totalorder 1, %s20
      %p221 = scmp.lt.s32.totalorder %s20, 7
      %p222 = pnand %p220, %p221
      %p223 = pneg %p222
      // Predicated region
      $region9: #{tpu_custom_call.1} parent=5 // pred_check
        _
      $region10: #{tpu_custom_call.1} parent=5 // pred_check_branch
        %225 = sbr.rel (%p222) target = $region12
      $region11: #{tpu_custom_call.1} parent=5 // pred_region
        %s226 = ssub.s32 %s20, 1
        // Predicated region
        $region13: #{tpu_custom_call.1} parent=11 // pred_check
          %p227 = pneg %p79
        $region14: #{tpu_custom_call.1} parent=11 // pred_check_branch
          %229 = sbr.rel (%p227) target = $region16
        $region15: #{tpu_custom_call.1} parent=11 // pred_region
          _
        $region16: #{tpu_custom_call.1} parent=11 // pred_fallthru
          _
        // Predicated region
        $region17: #{tpu_custom_call.1} parent=11 // pred_check
          %p230 = pneg %p100
        $region18: #{tpu_custom_call.1} parent=11 // pred_check_branch
          %232 = sbr.rel (%p230) target = $region20
        $region19: #{tpu_custom_call.1} parent=11 // pred_region
          _
        $region20: #{tpu_custom_call.1} parent=11 // pred_fallthru
          _
      $region12: #{tpu_custom_call.1} parent=5 // pred_fallthru
        _
      %p233 = scmp.lt.s32.totalorder %s20, 6
      // Predicated region
      $region21: #{tpu_custom_call.1} parent=5 // pred_check
        %p234 = pneg %p233
      $region22: #{tpu_custom_call.1} parent=5 // pred_check_branch
        %236 = sbr.rel (%p234) target = $region24
      $region23: #{tpu_custom_call.1} parent=5 // pred_region
        // Predicated region
        $region25: #{tpu_custom_call.1} parent=23 // pred_check
          %p237 = pneg %p52
        $region26: #{tpu_custom_call.1} parent=23 // pred_check_branch
          %239 = sbr.rel (%p237) target = $region28
        $region27: #{tpu_custom_call.1} parent=23 // pred_region
          %s240 = smul.u32 3, %s28
          %p241 = scmp.lt.s32.totalorder %s240, 8
          %s242 = scalar_select %p241, %s240, 8
          %s243 = scalar_lea.vmem %s1, %s242
          %s244 = smul.u32 3, %s28
        $region28: #{tpu_custom_call.1} parent=23 // pred_fallthru
          _
      $region24: #{tpu_custom_call.1} parent=5 // pred_fallthru
        _
      %p245 = scmp.le.s32.totalorder 1, %s20
      %p246 = scmp.lt.s32.totalorder %s20, 7
      %p247 = pnand %p245, %p246
      %p248 = pneg %p247
      // Predicated region
      $region29: #{tpu_custom_call.1} parent=5 // pred_check
        _
      $region30: #{tpu_custom_call.1} parent=5 // pred_check_branch
        %250 = sbr.rel (%p247) target = $region32
      $region31: #{tpu_custom_call.1} parent=5 // pred_region
        %s251 = ssub.s32 %s20, 1
        %s252 = smul.u32 3, %s30
        %p253 = scmp.lt.s32.totalorder %s252, 8
        %s254 = scalar_select %p253, %s252, 8
        %s255 = scalar_lea.vmem %s1, %s254
        %p256 = pneg %p58
        %p257 = pneg %p55
        %p258 = pneg %p79
        %p259 = pneg %p76
        %p260 = pneg %p100
        %p261 = pneg %p97
        %p262 = pneg %p128
        %p263 = pneg %p125
        %s264 = sand.u32 %s115, 1
        %s265 = scalar_lea.sflag [#allocation5], %s264
        %s266 = sand.u32 %s115, 1
        %s267 = smul.addr %s266, 12
        %s268 = scalar_lea.vmem [#allocation4], %s267
        %p269 = pneg %p156
        %p270 = pneg %p153
        %s271 = sand.u32 %s143, 1
        %s272 = scalar_lea.sflag [#allocation7], %s271
        %s273 = sand.u32 %s143, 1
        %s274 = smul.addr %s273, 12
        %s275 = scalar_lea.vmem [#allocation6], %s274
        %p276 = pneg %p184
        %p277 = pneg %p181
        %p278 = scmp.lt.s32.totalorder %s29, 1
        %s279 = scalar_select %p278, %s29, 1
        %p280 = scmp.lt.s32.totalorder %s30, 2
        %s281 = scalar_select %p280, %s30, 2
        %s282 = smul.addr %s279, 3
        %s283 = sadd.s32 %s281, %s282
        %s284 = smul.addr %s283, 4
        %s285 = scalar_lea.vmem %s6, %s284
        %p286 = pneg %p212
        %p287 = pneg %p209
        %p288 = scmp.lt.s32.totalorder %s29, 1
        %s289 = scalar_select %p288, %s29, 1
        %p290 = scmp.lt.s32.totalorder %s30, 2
        %s291 = scalar_select %p290, %s30, 2
        %s292 = smul.addr %s289, 3
        %s293 = sadd.s32 %s291, %s292
        %s294 = smul.addr %s293, 4
        %s295 = scalar_lea.vmem %s7, %s294
        %s296 = smul.u32 3, %s30
        %p297 = scmp.lt.s32.totalorder %s296, 8
        %s298 = scalar_select %p297, %s296, 8
        %s299 = scalar_lea.vmem %s1, %s298
        %s300 = smul.u32 3, %s30
        %s301 = smul.u32 3, %s30
        %s302 = smul.u32 3, %s30
        %p303 = scmp.lt.s32.totalorder %s29, 1
        %s304 = scalar_select %p303, %s29, 1
        %p305 = scmp.lt.s32.totalorder %s30, 2
        %s306 = scalar_select %p305, %s30, 2
        %s307 = smul.addr %s304, 3
        %s308 = sadd.s32 %s306, %s307
        %s309 = smul.addr %s308, 4
        %s310 = scalar_lea.vmem %s6, %s309
        %p311 = scmp.lt.s32.totalorder %s29, 1
        %s312 = scalar_select %p311, %s29, 1
        %p313 = scmp.lt.s32.totalorder %s30, 2
        %s314 = scalar_select %p313, %s30, 2
        %s315 = smul.addr %s312, 3
        %s316 = sadd.s32 %s314, %s315
        %s317 = smul.addr %s316, 4
        %s318 = scalar_lea.vmem %s7, %s317
        %s319 = smul.u32 %s30, 384
        %s320 = sshra.s32 %s319, 7
        %s321 = sand.u32 %s319, 127
        %s322 = smul.u32 %s29, 11
        %s323 = sadd.s32 %s320, %s322
        %s324 = smul.addr %s323, 4
        %s325 = scalar_lea.vmem %s0, %s324
        // Predicated region
        $region33: #{tpu_custom_call.1} parent=31 // pred_check
          _
        $region34: #{tpu_custom_call.1} parent=31 // pred_check_branch
          %327 = sbr.rel (0) target = $region36
        $region35: #{tpu_custom_call.1} parent=31 // pred_region
          %s328 = scalar_lea.vmem %s325, 16
          %s329 = scalar_lea.vmem [#allocation2], 16
          loop: start=0, step=1, limit=1
          $region37: #{tpu_custom_call.1} parent=35 // loop_pre_header
            _
          $region38: #{tpu_custom_call.1} parent=35 // loop_header
            %s331 = sphi 0, %s335
            %p332 = scmp.ge.s32.totalorder %s331, 1
            %s336 = sphi %s325, %s325
            %s337 = sphi [#allocation2], [#allocation2]
          $region39: #{tpu_custom_call.1} parent=35 // loop_header_branch
            %334 = sbr.rel (%p332) target = $region43
          $region40: #{tpu_custom_call.1} parent=35 // loop_body
            %v338 = vld [vmem:[%s336] sm:$0xff]
            %339 = vst [vmem:[%s337] sm:$0xff] %v338
            %v340 = vld [vmem:[%s336 + $0x8] sm:$0xff]
            %341 = vst [vmem:[%s337 + $0x8] sm:$0xff] %v340
          $region41: #{tpu_custom_call.1} parent=35 // loop_footer
            %s335 = sadd.s32 1, %s331
          $region42: #{tpu_custom_call.1} parent=35 // loop_footer_branch
            %330 = sbr.rel target = $region38
          $region43: #{tpu_custom_call.1} parent=35 // loop_exit
            _
          %s343 = ssub.s32 16, 1
          loop: start=0, step=1, limit=1
          $region44: #{tpu_custom_call.1} parent=35 // loop_pre_header
            _
          $region45: #{tpu_custom_call.1} parent=35 // loop_header
            %s345 = sphi 0, %s349
            %p346 = scmp.ge.s32.totalorder %s345, 1
            %s350 = sphi %s328, %s328
            %s351 = sphi %s329, %s329
          $region46: #{tpu_custom_call.1} parent=35 // loop_header_branch
            %348 = sbr.rel (%p346) target = $region50
          $region47: #{tpu_custom_call.1} parent=35 // loop_body
            %v352 = vld [vmem:[%s350] sm:%s343]
            %353 = vst [vmem:[%s351] sm:%s343] %v352
          $region48: #{tpu_custom_call.1} parent=35 // loop_footer
            %s349 = sadd.s32 1, %s345
          $region49: #{tpu_custom_call.1} parent=35 // loop_footer_branch
            %344 = sbr.rel target = $region45
          $region50: #{tpu_custom_call.1} parent=35 // loop_exit
            _
        $region36: #{tpu_custom_call.1} parent=31 // pred_fallthru
          _
        // Predicated region
        $region51: #{tpu_custom_call.1} parent=31 // pred_check
          _
        $region52: #{tpu_custom_call.1} parent=31 // pred_check_branch
          %356 = sbr.rel (0) target = $region54
        $region53: #{tpu_custom_call.1} parent=31 // pred_region
          %357 = vsyncadd [#allocation3], 320
        $region54: #{tpu_custom_call.1} parent=31 // pred_fallthru
          _
        %s358 = smul.u32 4, 1
        %s359 = smul.u32 %s358, 5
        %s360 = sshll.u32 %s359, 4
        %361 = dma.done [#allocation3], %s360
        %v362 = vld [vmem:[#allocation2] sm:$0xff]
        %v363 = vld [vmem:[#allocation2 + $0x8] sm:$0xff]
        %v364 = vld [vmem:[#allocation2 + $0x10] sm:$0xf]
        %v365 = vld [vmem:[%s2] sm:$0xf]
        %v366 = vld [vmem:[%s2 + $0x4] sm:$0xf]
        %v367 = vld [vmem:[%s2 + $0x8] sm:$0xf]
        %v368 = vld [vmem:[%s2 + $0xc] sm:$0xf]
        %v369 = vld [vmem:[%s2 + $0x10] sm:$0xf]
        %v370 = vld [vmem:[%s2 + $0x14] sm:$0xf]
        %v371 = vld [vmem:[%s2 + $0x18] sm:$0xf]
        %v372 = vld [vmem:[%s2 + $0x1c] sm:$0xf]
        %v373 = vld [vmem:[%s2 + $0x20] sm:$0xf]
        %v374 = vld [vmem:[%s2 + $0x24] sm:$0xf]
        %v375 = vld [vmem:[%s2 + $0x28] sm:$0xf]
        %v376 = vld [vmem:[%s2 + $0x2c] sm:$0xf]
        %v377 = vld [vmem:[%s2 + $0x30] sm:$0xf]
        %v378 = vld [vmem:[%s2 + $0x34] sm:$0xf]
        %v379 = vld [vmem:[%s2 + $0x38] sm:$0xf]
        %v380 = vld [vmem:[%s2 + $0x3c] sm:$0xf]
        %v381 = vld [vmem:[%s2 + $0x40] sm:$0xf]
        %v382 = vld [vmem:[%s2 + $0x44] sm:$0xf]
        %v383 = vld [vmem:[%s2 + $0x48] sm:$0xf]
        %v384 = vld [vmem:[%s2 + $0x4c] sm:$0xf]
        %v385 = vld [vmem:[%s2 + $0x50] sm:$0xf]
        %v386 = vld [vmem:[%s2 + $0x54] sm:$0xf]
        %v387 = vld [vmem:[%s2 + $0x58] sm:$0xf]
        %v388 = vld [vmem:[%s2 + $0x5c] sm:$0xf]
        %v389 = vld [vmem:[%s2 + $0x60] sm:$0xf]
        %v390 = vld [vmem:[%s2 + $0x64] sm:$0xf]
        %v391 = vld [vmem:[%s2 + $0x68] sm:$0xf]
        %v392 = vld [vmem:[%s299] sm:$0x7]
        %394 = vset.pattern.permute.xlu0 0
        %395 = vperm.xlu0 %394, %v365
        %v396 = vpop.permute.xlu0 %395
        %v398 = vunpack.c.l.s4 839922192
        %v399 = vunpack.c.0.s8 %v398
        %v400 = vperm.slane %v396, %v399
        %v402 = vmul.f32 %v362, %v400
        %v403 = vmul.f32 %v363, %v400
        %v404 = vadd.f32 %v402, 0.0
        %v405 = vadd.f32 %v403, 0.0
        %407 = vset.pattern.permute.xlu0 0
        %408 = vperm.xlu0 %407, %v374
        %v409 = vpop.permute.xlu0 %408
        %v412 = vrot.slane %v362, 4
        %v413 = vrot.slane %v363, 4
        %vm414 = vcmask 1043456
        %v415 = vsel %vm414, %v412, %v413
        %v419 = vunpack.c.l.s4 839922192
        %v420 = vunpack.c.0.s8 %v419
        %v421 = vperm.slane %v409, %v420
        %v423 = vmul.f32 %v415, %v421
        %v424 = vmul.f32 %v413, %v421
        %v425 = vadd.f32 %v404, %v423
        %v426 = vadd.f32 %v405, %v424
        %428 = vset.pattern.permute.xlu0 0
        %429 = vperm.xlu0 %428, %v383
        %v430 = vpop.permute.xlu0 %429
        %v432 = vunpack.c.l.s4 839922192
        %v433 = vunpack.c.0.s8 %v432
        %v434 = vperm.slane %v430, %v433
        %v436 = vmul.f32 %v363, %v434
        %v437 = vmul.f32 %v364, %v434
        %v438 = vadd.f32 %v425, %v436
        %v439 = vadd.f32 %v426, %v437
        %441 = vst [vmem:[#allocation1] ss:$2 sm:$0xff] %v362
        %s442 = scalar_lea.vmem [#allocation1], 16
        %443 = vst [vmem:[%s442] ss:$2 sm:$0xff] %v363
        %s444 = scalar_lea.vmem [#allocation1], 32
        %445 = vst [vmem:[%s444] ss:$2 sm:$0xff] %v364
        %v446 = vld.sshfl [vmem:[#allocation1] sm:$0xff pattern:$0x75316420]
        %v447 = vld.sshfl [vmem:[#allocation1 + $0x8] sm:$0xff pattern:$0x75316420]
        %v448 = vld.sshfl [vmem:[#allocation1 + $0x10] sm:$0xff pattern:$0x75316420]
        %v449 = vld.sshfl [vmem:[#allocation1 + $0x18] sm:$0xff pattern:$0x75316420]
        %v450 = vld.sshfl [vmem:[#allocation1 + $0x20] sm:$0xff pattern:$0x75316420]
        %456 = vrot.lane.b32.xlu0 %v446, 127
        %v457 = vpop.permute.xlu0 %456
        %458 = vrot.lane.b32.xlu0 %v447, 127
        %v459 = vpop.permute.xlu0 %458
        %460 = vrot.lane.b32.xlu0 %v448, 127
        %v461 = vpop.permute.xlu0 %460
        %462 = vrot.lane.b32.xlu0 %v449, 127
        %v463 = vpop.permute.xlu0 %462
        %464 = vrot.lane.b32.xlu0 %v450, 127
        %v465 = vpop.permute.xlu0 %464
        %v466 = vlaneseq
        %v467 = vand.u32 %v466, 127
        %vm468 = vcmp.lt.s32.totalorder %v467, 127
        %v469 = vsel %vm468, %v463, %v465
        %v470 = vsel %vm468, %v461, %v463
        %v471 = vsel %vm468, %v459, %v461
        %v472 = vsel %vm468, %v457, %v459
        %v473 = vsel %vm468, %v465, %v457
        %475 = vset.pattern.permute.xlu0 0
        %476 = vperm.xlu0 %475, %v366
        %v477 = vpop.permute.xlu0 %476
        %v479 = vmul.f32 %v472, %v477
        %v480 = vmul.f32 %v471, %v477
        %v481 = vmul.f32 %v470, %v477
        %v484 = vrot.slane %v480, 4
        %v485 = vsel %vm414, %v479, %v484
        %v487 = vadd.f32 %v438, %v485
        %v488 = vadd.f32 %v439, %v481
        %490 = vset.pattern.permute.xlu0 0
        %491 = vperm.xlu0 %490, %v375
        %v492 = vpop.permute.xlu0 %491
        %v494 = vmul.f32 %v471, %v492
        %v495 = vmul.f32 %v470, %v492
        %v496 = vmul.f32 %v469, %v492
        %v499 = vrot.slane %v495, 4
        %v500 = vsel %vm414, %v494, %v499
        %v502 = vadd.f32 %v487, %v500
        %v503 = vadd.f32 %v488, %v496
        %505 = vset.pattern.permute.xlu0 0
        %506 = vperm.xlu0 %505, %v384
        %v507 = vpop.permute.xlu0 %506
        %v509 = vmul.f32 %v470, %v507
        %v510 = vmul.f32 %v469, %v507
        %v511 = vmul.f32 %v473, %v507
        %v514 = vrot.slane %v510, 4
        %v515 = vsel %vm414, %v509, %v514
        %v517 = vadd.f32 %v502, %v515
        %v518 = vadd.f32 %v503, %v511
        %519 = vst [vmem:[#allocation1] ss:$2 sm:$0xff] %v362
        %s520 = scalar_lea.vmem [#allocation1], 16
        %521 = vst [vmem:[%s520] ss:$2 sm:$0xff] %v363
        %s522 = scalar_lea.vmem [#allocation1], 32
        %523 = vst [vmem:[%s522] ss:$2 sm:$0xff] %v364
        %v524 = vld.sshfl [vmem:[#allocation1] sm:$0xff pattern:$0x75316420]
        %v525 = vld.sshfl [vmem:[#allocation1 + $0x8] sm:$0xff pattern:$0x75316420]
        %v526 = vld.sshfl [vmem:[#allocation1 + $0x10] sm:$0xff pattern:$0x75316420]
        %v527 = vld.sshfl [vmem:[#allocation1 + $0x18] sm:$0xff pattern:$0x75316420]
        %v528 = vld.sshfl [vmem:[#allocation1 + $0x20] sm:$0xff pattern:$0x75316420]
        %534 = vrot.lane.b32.xlu0 %v524, 126
        %v535 = vpop.permute.xlu0 %534
        %536 = vrot.lane.b32.xlu0 %v525, 126
        %v537 = vpop.permute.xlu0 %536
        %538 = vrot.lane.b32.xlu0 %v526, 126
        %v539 = vpop.permute.xlu0 %538
        %540 = vrot.lane.b32.xlu0 %v527, 126
        %v541 = vpop.permute.xlu0 %540
        %542 = vrot.lane.b32.xlu0 %v528, 126
        %v543 = vpop.permute.xlu0 %542
        %vm544 = vcmp.lt.s32.totalorder %v467, 126
        %v545 = vsel %vm544, %v541, %v543
        %v546 = vsel %vm544, %v539, %v541
        %v547 = vsel %vm544, %v537, %v539
        %v548 = vsel %vm544, %v535, %v537
        %v549 = vsel %vm544, %v543, %v535
        %551 = vset.pattern.permute.xlu0 0
        %552 = vperm.xlu0 %551, %v367
        %v553 = vpop.permute.xlu0 %552
        %v555 = vmul.f32 %v548, %v553
        %v556 = vmul.f32 %v547, %v553
        %v557 = vmul.f32 %v546, %v553
        %v560 = vrot.slane %v556, 4
        %v561 = vsel %vm414, %v555, %v560
        %v563 = vadd.f32 %v517, %v561
        %v564 = vadd.f32 %v518, %v557
        %566 = vset.pattern.permute.xlu0 0
        %567 = vperm.xlu0 %566, %v376
        %v568 = vpop.permute.xlu0 %567
        %v570 = vmul.f32 %v547, %v568
        %v571 = vmul.f32 %v546, %v568
        %v572 = vmul.f32 %v545, %v568
        %v575 = vrot.slane %v571, 4
        %v576 = vsel %vm414, %v570, %v575
        %v578 = vadd.f32 %v563, %v576
        %v579 = vadd.f32 %v564, %v572
        %581 = vset.pattern.permute.xlu0 0
        %582 = vperm.xlu0 %581, %v385
        %v583 = vpop.permute.xlu0 %582
        %v585 = vmul.f32 %v546, %v583
        %v586 = vmul.f32 %v545, %v583
        %v587 = vmul.f32 %v549, %v583
        %v590 = vrot.slane %v586, 4
        %v591 = vsel %vm414, %v585, %v590
        %v593 = vadd.f32 %v578, %v591
        %v594 = vadd.f32 %v579, %v587
        %595 = vst [vmem:[#allocation1] ss:$2 sm:$0xff] %v362
        %s596 = scalar_lea.vmem [#allocation1], 16
        %597 = vst [vmem:[%s596] ss:$2 sm:$0xff] %v363
        %s598 = scalar_lea.vmem [#allocation1], 32
        %599 = vst [vmem:[%s598] ss:$2 sm:$0xff] %v364
        %v600 = vld.sshfl [vmem:[#allocation1] sm:$0xff pattern:$0x75316420]
        %v601 = vld.sshfl [vmem:[#allocation1 + $0x8] sm:$0xff pattern:$0x75316420]
        %v602 = vld.sshfl [vmem:[#allocation1 + $0x10] sm:$0xff pattern:$0x75316420]
        %v603 = vld.sshfl [vmem:[#allocation1 + $0x18] sm:$0xff pattern:$0x75316420]
        %v604 = vld.sshfl [vmem:[#allocation1 + $0x20] sm:$0xff pattern:$0x75316420]
        %610 = vrot.lane.b32.xlu0 %v600, 118
        %v611 = vpop.permute.xlu0 %610
        %612 = vrot.lane.b32.xlu0 %v601, 118
        %v613 = vpop.permute.xlu0 %612
        %614 = vrot.lane.b32.xlu0 %v602, 118
        %v615 = vpop.permute.xlu0 %614
        %616 = vrot.lane.b32.xlu0 %v603, 118
        %v617 = vpop.permute.xlu0 %616
        %618 = vrot.lane.b32.xlu0 %v604, 118
        %v619 = vpop.permute.xlu0 %618
        %vm620 = vcmp.lt.s32.totalorder %v467, 118
        %v621 = vsel %vm620, %v617, %v619
        %v622 = vsel %vm620, %v615, %v617
        %v623 = vsel %vm620, %v613, %v615
        %v624 = vsel %vm620, %v611, %v613
        %v625 = vsel %vm620, %v619, %v611
        %627 = vset.pattern.permute.xlu0 0
        %628 = vperm.xlu0 %627, %v368
        %v629 = vpop.permute.xlu0 %628
        %v631 = vmul.f32 %v624, %v629
        %v632 = vmul.f32 %v623, %v629
        %v633 = vmul.f32 %v622, %v629
        %v636 = vrot.slane %v632, 4
        %v637 = vsel %vm414, %v631, %v636
        %v639 = vadd.f32 %v593, %v637
        %v640 = vadd.f32 %v594, %v633
        %642 = vset.pattern.permute.xlu0 0
        %643 = vperm.xlu0 %642, %v377
        %v644 = vpop.permute.xlu0 %643
        %v646 = vmul.f32 %v623, %v644
        %v647 = vmul.f32 %v622, %v644
        %v648 = vmul.f32 %v621, %v644
        %v651 = vrot.slane %v647, 4
        %v652 = vsel %vm414, %v646, %v651
        %v654 = vadd.f32 %v639, %v652
        %v655 = vadd.f32 %v640, %v648
        %657 = vset.pattern.permute.xlu0 0
        %658 = vperm.xlu0 %657, %v386
        %v659 = vpop.permute.xlu0 %658
        %v661 = vmul.f32 %v622, %v659
        %v662 = vmul.f32 %v621, %v659
        %v663 = vmul.f32 %v625, %v659
        %v666 = vrot.slane %v662, 4
        %v667 = vsel %vm414, %v661, %v666
        %v669 = vadd.f32 %v654, %v667
        %v670 = vadd.f32 %v655, %v663
        %671 = vst [vmem:[#allocation1] ss:$2 sm:$0xff] %v362
        %s672 = scalar_lea.vmem [#allocation1], 16
        %673 = vst [vmem:[%s672] ss:$2 sm:$0xff] %v363
        %s674 = scalar_lea.vmem [#allocation1], 32
        %675 = vst [vmem:[%s674] ss:$2 sm:$0xff] %v364
        %v676 = vld.sshfl [vmem:[#allocation1] sm:$0xff pattern:$0x75316420]
        %v677 = vld.sshfl [vmem:[#allocation1 + $0x8] sm:$0xff pattern:$0x75316420]
        %v678 = vld.sshfl [vmem:[#allocation1 + $0x10] sm:$0xff pattern:$0x75316420]
        %v679 = vld.sshfl [vmem:[#allocation1 + $0x18] sm:$0xff pattern:$0x75316420]
        %v680 = vld.sshfl [vmem:[#allocation1 + $0x20] sm:$0xff pattern:$0x75316420]
        %686 = vrot.lane.b32.xlu0 %v676, 117
        %v687 = vpop.permute.xlu0 %686
        %688 = vrot.lane.b32.xlu0 %v677, 117
        %v689 = vpop.permute.xlu0 %688
        %690 = vrot.lane.b32.xlu0 %v678, 117
        %v691 = vpop.permute.xlu0 %690
        %692 = vrot.lane.b32.xlu0 %v679, 117
        %v693 = vpop.permute.xlu0 %692
        %694 = vrot.lane.b32.xlu0 %v680, 117
        %v695 = vpop.permute.xlu0 %694
        %vm696 = vcmp.lt.s32.totalorder %v467, 117
        %v697 = vsel %vm696, %v693, %v695
        %v698 = vsel %vm696, %v691, %v693
        %v699 = vsel %vm696, %v689, %v691
        %v700 = vsel %vm696, %v687, %v689
        %v701 = vsel %vm696, %v695, %v687
        %703 = vset.pattern.permute.xlu0 0
        %704 = vperm.xlu0 %703, %v369
        %v705 = vpop.permute.xlu0 %704
        %v707 = vmul.f32 %v700, %v705
        %v708 = vmul.f32 %v699, %v705
        %v709 = vmul.f32 %v698, %v705
        %v712 = vrot.slane %v708, 4
        %v713 = vsel %vm414, %v707, %v712
        %v715 = vadd.f32 %v669, %v713
        %v716 = vadd.f32 %v670, %v709
        %718 = vset.pattern.permute.xlu0 0
        %719 = vperm.xlu0 %718, %v378
        %v720 = vpop.permute.xlu0 %719
        %v722 = vmul.f32 %v699, %v720
        %v723 = vmul.f32 %v698, %v720
        %v724 = vmul.f32 %v697, %v720
        %v727 = vrot.slane %v723, 4
        %v728 = vsel %vm414, %v722, %v727
        %v730 = vadd.f32 %v715, %v728
        %v731 = vadd.f32 %v716, %v724
        %733 = vset.pattern.permute.xlu0 0
        %734 = vperm.xlu0 %733, %v387
        %v735 = vpop.permute.xlu0 %734
        %v737 = vmul.f32 %v698, %v735
        %v738 = vmul.f32 %v697, %v735
        %v739 = vmul.f32 %v701, %v735
        %v742 = vrot.slane %v738, 4
        %v743 = vsel %vm414, %v737, %v742
        %v745 = vadd.f32 %v730, %v743
        %v746 = vadd.f32 %v731, %v739
        %747 = vst [vmem:[#allocation1] ss:$2 sm:$0xff] %v362
        %s748 = scalar_lea.vmem [#allocation1], 16
        %749 = vst [vmem:[%s748] ss:$2 sm:$0xff] %v363
        %s750 = scalar_lea.vmem [#allocation1], 32
        %751 = vst [vmem:[%s750] ss:$2 sm:$0xff] %v364
        %v752 = vld.sshfl [vmem:[#allocation1] sm:$0xff pattern:$0x75316420]
        %v753 = vld.sshfl [vmem:[#allocation1 + $0x8] sm:$0xff pattern:$0x75316420]
        %v754 = vld.sshfl [vmem:[#allocation1 + $0x10] sm:$0xff pattern:$0x75316420]
        %v755 = vld.sshfl [vmem:[#allocation1 + $0x18] sm:$0xff pattern:$0x75316420]
        %v756 = vld.sshfl [vmem:[#allocation1 + $0x20] sm:$0xff pattern:$0x75316420]
        %762 = vrot.lane.b32.xlu0 %v752, 116
        %v763 = vpop.permute.xlu0 %762
        %764 = vrot.lane.b32.xlu0 %v753, 116
        %v765 = vpop.permute.xlu0 %764
        %766 = vrot.lane.b32.xlu0 %v754, 116
        %v767 = vpop.permute.xlu0 %766
        %768 = vrot.lane.b32.xlu0 %v755, 116
        %v769 = vpop.permute.xlu0 %768
        %770 = vrot.lane.b32.xlu0 %v756, 116
        %v771 = vpop.permute.xlu0 %770
        %vm772 = vcmp.lt.s32.totalorder %v467, 116
        %v773 = vsel %vm772, %v769, %v771
        %v774 = vsel %vm772, %v767, %v769
        %v775 = vsel %vm772, %v765, %v767
        %v776 = vsel %vm772, %v763, %v765
        %v777 = vsel %vm772, %v771, %v763
        %779 = vset.pattern.permute.xlu0 0
        %780 = vperm.xlu0 %779, %v370
        %v781 = vpop.permute.xlu0 %780
        %v783 = vmul.f32 %v776, %v781
        %v784 = vmul.f32 %v775, %v781
        %v785 = vmul.f32 %v774, %v781
        %v788 = vrot.slane %v784, 4
        %v789 = vsel %vm414, %v783, %v788
        %v791 = vadd.f32 %v745, %v789
        %v792 = vadd.f32 %v746, %v785
        %794 = vset.pattern.permute.xlu0 0
        %795 = vperm.xlu0 %794, %v379
        %v796 = vpop.permute.xlu0 %795
        %v798 = vmul.f32 %v775, %v796
        %v799 = vmul.f32 %v774, %v796
        %v800 = vmul.f32 %v773, %v796
        %v803 = vrot.slane %v799, 4
        %v804 = vsel %vm414, %v798, %v803
        %v806 = vadd.f32 %v791, %v804
        %v807 = vadd.f32 %v792, %v800
        %809 = vset.pattern.permute.xlu0 0
        %810 = vperm.xlu0 %809, %v388
        %v811 = vpop.permute.xlu0 %810
        %v813 = vmul.f32 %v774, %v811
        %v814 = vmul.f32 %v773, %v811
        %v815 = vmul.f32 %v777, %v811
        %v818 = vrot.slane %v814, 4
        %v819 = vsel %vm414, %v813, %v818
        %v821 = vadd.f32 %v806, %v819
        %v822 = vadd.f32 %v807, %v815
        %823 = vst [vmem:[#allocation1] ss:$2 sm:$0xff] %v362
        %s824 = scalar_lea.vmem [#allocation1], 16
        %825 = vst [vmem:[%s824] ss:$2 sm:$0xff] %v363
        %s826 = scalar_lea.vmem [#allocation1], 32
        %827 = vst [vmem:[%s826] ss:$2 sm:$0xff] %v364
        %v828 = vld.sshfl [vmem:[#allocation1] sm:$0xff pattern:$0x75316420]
        %v829 = vld.sshfl [vmem:[#allocation1 + $0x8] sm:$0xff pattern:$0x75316420]
        %v830 = vld.sshfl [vmem:[#allocation1 + $0x10] sm:$0xff pattern:$0x75316420]
        %v831 = vld.sshfl [vmem:[#allocation1 + $0x18] sm:$0xff pattern:$0x75316420]
        %v832 = vld.sshfl [vmem:[#allocation1 + $0x20] sm:$0xff pattern:$0x75316420]
        %838 = vrot.lane.b32.xlu0 %v828, 108
        %v839 = vpop.permute.xlu0 %838
        %840 = vrot.lane.b32.xlu0 %v829, 108
        %v841 = vpop.permute.xlu0 %840
        %842 = vrot.lane.b32.xlu0 %v830, 108
        %v843 = vpop.permute.xlu0 %842
        %844 = vrot.lane.b32.xlu0 %v831, 108
        %v845 = vpop.permute.xlu0 %844
        %846 = vrot.lane.b32.xlu0 %v832, 108
        %v847 = vpop.permute.xlu0 %846
        %vm848 = vcmp.lt.s32.totalorder %v467, 108
        %v849 = vsel %vm848, %v845, %v847
        %v850 = vsel %vm848, %v843, %v845
        %v851 = vsel %vm848, %v841, %v843
        %v852 = vsel %vm848, %v839, %v841
        %v853 = vsel %vm848, %v847, %v839
        %855 = vset.pattern.permute.xlu0 0
        %856 = vperm.xlu0 %855, %v371
        %v857 = vpop.permute.xlu0 %856
        %v859 = vmul.f32 %v852, %v857
        %v860 = vmul.f32 %v851, %v857
        %v861 = vmul.f32 %v850, %v857
        %v864 = vrot.slane %v860, 4
        %v865 = vsel %vm414, %v859, %v864
        %v867 = vadd.f32 %v821, %v865
        %v868 = vadd.f32 %v822, %v861
        %870 = vset.pattern.permute.xlu0 0
        %871 = vperm.xlu0 %870, %v380
        %v872 = vpop.permute.xlu0 %871
        %v874 = vmul.f32 %v851, %v872
        %v875 = vmul.f32 %v850, %v872
        %v876 = vmul.f32 %v849, %v872
        %v879 = vrot.slane %v875, 4
        %v880 = vsel %vm414, %v874, %v879
        %v882 = vadd.f32 %v867, %v880
        %v883 = vadd.f32 %v868, %v876
        %885 = vset.pattern.permute.xlu0 0
        %886 = vperm.xlu0 %885, %v389
        %v887 = vpop.permute.xlu0 %886
        %v889 = vmul.f32 %v850, %v887
        %v890 = vmul.f32 %v849, %v887
        %v891 = vmul.f32 %v853, %v887
        %v894 = vrot.slane %v890, 4
        %v895 = vsel %vm414, %v889, %v894
        %v897 = vadd.f32 %v882, %v895
        %v898 = vadd.f32 %v883, %v891
        %899 = vst [vmem:[#allocation1] ss:$2 sm:$0xff] %v362
        %s900 = scalar_lea.vmem [#allocation1], 16
        %901 = vst [vmem:[%s900] ss:$2 sm:$0xff] %v363
        %s902 = scalar_lea.vmem [#allocation1], 32
        %903 = vst [vmem:[%s902] ss:$2 sm:$0xff] %v364
        %v904 = vld.sshfl [vmem:[#allocation1] sm:$0xff pattern:$0x75316420]
        %v905 = vld.sshfl [vmem:[#allocation1 + $0x8] sm:$0xff pattern:$0x75316420]
        %v906 = vld.sshfl [vmem:[#allocation1 + $0x10] sm:$0xff pattern:$0x75316420]
        %v907 = vld.sshfl [vmem:[#allocation1 + $0x18] sm:$0xff pattern:$0x75316420]
        %v908 = vld.sshfl [vmem:[#allocation1 + $0x20] sm:$0xff pattern:$0x75316420]
        %914 = vrot.lane.b32.xlu0 %v904, 107
        %v915 = vpop.permute.xlu0 %914
        %916 = vrot.lane.b32.xlu0 %v905, 107
        %v917 = vpop.permute.xlu0 %916
        %918 = vrot.lane.b32.xlu0 %v906, 107
        %v919 = vpop.permute.xlu0 %918
        %920 = vrot.lane.b32.xlu0 %v907, 107
        %v921 = vpop.permute.xlu0 %920
        %922 = vrot.lane.b32.xlu0 %v908, 107
        %v923 = vpop.permute.xlu0 %922
        %vm924 = vcmp.lt.s32.totalorder %v467, 107
        %v925 = vsel %vm924, %v921, %v923
        %v926 = vsel %vm924, %v919, %v921
        %v927 = vsel %vm924, %v917, %v919
        %v928 = vsel %vm924, %v915, %v917
        %v929 = vsel %vm924, %v923, %v915
        %931 = vset.pattern.permute.xlu0 0
        %932 = vperm.xlu0 %931, %v372
        %v933 = vpop.permute.xlu0 %932
        %v935 = vmul.f32 %v928, %v933
        %v936 = vmul.f32 %v927, %v933
        %v937 = vmul.f32 %v926, %v933
        %v940 = vrot.slane %v936, 4
        %v941 = vsel %vm414, %v935, %v940
        %v943 = vadd.f32 %v897, %v941
        %v944 = vadd.f32 %v898, %v937
        %946 = vset.pattern.permute.xlu0 0
        %947 = vperm.xlu0 %946, %v381
        %v948 = vpop.permute.xlu0 %947
        %v950 = vmul.f32 %v927, %v948
        %v951 = vmul.f32 %v926, %v948
        %v952 = vmul.f32 %v925, %v948
        %v955 = vrot.slane %v951, 4
        %v956 = vsel %vm414, %v950, %v955
        %v958 = vadd.f32 %v943, %v956
        %v959 = vadd.f32 %v944, %v952
        %961 = vset.pattern.permute.xlu0 0
        %962 = vperm.xlu0 %961, %v390
        %v963 = vpop.permute.xlu0 %962
        %v965 = vmul.f32 %v926, %v963
        %v966 = vmul.f32 %v925, %v963
        %v967 = vmul.f32 %v929, %v963
        %v970 = vrot.slane %v966, 4
        %v971 = vsel %vm414, %v965, %v970
        %v973 = vadd.f32 %v958, %v971
        %v974 = vadd.f32 %v959, %v967
        %975 = vst [vmem:[#allocation1] ss:$2 sm:$0xff] %v362
        %s976 = scalar_lea.vmem [#allocation1], 16
        %977 = vst [vmem:[%s976] ss:$2 sm:$0xff] %v363
        %s978 = scalar_lea.vmem [#allocation1], 32
        %979 = vst [vmem:[%s978] ss:$2 sm:$0xff] %v364
        %v980 = vld.sshfl [vmem:[#allocation1] sm:$0xff pattern:$0x75316420]
        %v981 = vld.sshfl [vmem:[#allocation1 + $0x8] sm:$0xff pattern:$0x75316420]
        %v982 = vld.sshfl [vmem:[#allocation1 + $0x10] sm:$0xff pattern:$0x75316420]
        %v983 = vld.sshfl [vmem:[#allocation1 + $0x18] sm:$0xff pattern:$0x75316420]
        %v984 = vld.sshfl [vmem:[#allocation1 + $0x20] sm:$0xff pattern:$0x75316420]
        %990 = vrot.lane.b32.xlu0 %v980, 106
        %v991 = vpop.permute.xlu0 %990
        %992 = vrot.lane.b32.xlu0 %v981, 106
        %v993 = vpop.permute.xlu0 %992
        %994 = vrot.lane.b32.xlu0 %v982, 106
        %v995 = vpop.permute.xlu0 %994
        %996 = vrot.lane.b32.xlu0 %v983, 106
        %v997 = vpop.permute.xlu0 %996
        %998 = vrot.lane.b32.xlu0 %v984, 106
        %v999 = vpop.permute.xlu0 %998
        %vm1000 = vcmp.lt.s32.totalorder %v467, 106
        %v1001 = vsel %vm1000, %v997, %v999
        %v1002 = vsel %vm1000, %v995, %v997
        %v1003 = vsel %vm1000, %v993, %v995
        %v1004 = vsel %vm1000, %v991, %v993
        %v1005 = vsel %vm1000, %v999, %v991
        %1007 = vset.pattern.permute.xlu0 0
        %1008 = vperm.xlu0 %1007, %v373
        %v1009 = vpop.permute.xlu0 %1008
        %v1011 = vmul.f32 %v1004, %v1009
        %v1012 = vmul.f32 %v1003, %v1009
        %v1013 = vmul.f32 %v1002, %v1009
        %v1016 = vrot.slane %v1012, 4
        %v1017 = vsel %vm414, %v1011, %v1016
        %v1019 = vadd.f32 %v973, %v1017
        %v1020 = vadd.f32 %v974, %v1013
        %1022 = vset.pattern.permute.xlu0 0
        %1023 = vperm.xlu0 %1022, %v382
        %v1024 = vpop.permute.xlu0 %1023
        %v1026 = vmul.f32 %v1003, %v1024
        %v1027 = vmul.f32 %v1002, %v1024
        %v1028 = vmul.f32 %v1001, %v1024
        %v1031 = vrot.slane %v1027, 4
        %v1032 = vsel %vm414, %v1026, %v1031
        %v1034 = vadd.f32 %v1019, %v1032
        %v1035 = vadd.f32 %v1020, %v1028
        %1037 = vset.pattern.permute.xlu0 0
        %1038 = vperm.xlu0 %1037, %v391
        %v1039 = vpop.permute.xlu0 %1038
        %v1041 = vmul.f32 %v1002, %v1039
        %v1042 = vmul.f32 %v1001, %v1039
        %v1043 = vmul.f32 %v1005, %v1039
        %v1046 = vrot.slane %v1042, 4
        %v1047 = vsel %vm414, %v1041, %v1046
        %v1049 = vadd.f32 %v1034, %v1047
        %v1050 = vadd.f32 %v1035, %v1043
        %v1051 = vld [vmem:[%s3] sm:$0xf]
        %1053 = vset.pattern.permute.xlu0 0
        %1054 = vperm.xlu0 %1053, %v1051
        %v1055 = vpop.permute.xlu0 %1054
        %v1057 = vunpack.c.l.s4 839922192
        %v1058 = vunpack.c.0.s8 %v1057
        %v1059 = vperm.slane %v1055, %v1058
        %v1061 = vadd.f32 %v1049, %v1059
        %v1062 = vadd.f32 %v1050, %v1059
        %v1064 = vperm.slane %v392, 0
        %v1065 = vperm.slane %v392, 1
        %v1066 = vperm.slane %v392, 2
        %v1068 = vrot.slane %v1065, 4
        %v1069 = vsel %vm414, %v1064, %v1068
        %v1071 = vmul.f32 %v1061, %v1069
        %v1072 = vmul.f32 %v1062, %v1066
        %1073 = vst [vmem:[%s268] sm:$0xff] %v1071
        %1074 = vst [vmem:[%s268 + $0x8] sm:$0xf] %v1072
        %v1077 = vrot.slane %v698, 4
        %v1078 = vsel %vm414, %v699, %v1077
        %1080 = vst [vmem:[%s275] sm:$0xff] %v1078
        %1081 = vst [vmem:[%s275 + $0x8] sm:$0xf] %v697
        %1084 = vst [vmem:[#allocation1] ss:$2 sm:$0xff] %v1071
        %s1085 = scalar_lea.vmem [#allocation1], 16
        %1086 = vst [vmem:[%s1085] ss:$2 sm:$0xff] %v1072
        %v1087 = vld.sshfl [vmem:[#allocation1] sm:$0xff pattern:$0x75316420]
        %v1088 = vld.sshfl [vmem:[#allocation1 + $0x8] sm:$0xff pattern:$0x75316420]
        %v1089 = vld.sshfl [vmem:[#allocation1 + $0x10] sm:$0xff pattern:$0x75316420]
        %v1093 = vsel %vm414, %v1087, 0.0
        %v1094 = vsel %vm414, %v1088, 0.0
        %v1095 = vadd.f32 %v1093, %v1094
        %v1096 = vsel %vm414, %v1089, 0.0
        %v1097 = vadd.f32 %v1095, %v1096
        %1098 = vadd.xlane.f32.xlu0 %v1097
        %v1099 = vpop.xlane.xlu0 %1098
        %vm1100 = vcmask 3072
        %1101 = vst.msk [vmem:[%s310] sm:$0xf] %vm1100, %v1099
        %v1102 = vmul.f32 %v1071, %v1071
        %v1103 = vmul.f32 %v1072, %v1072
        %1106 = vst [vmem:[#allocation1] ss:$2 sm:$0xff] %v1102
        %s1107 = scalar_lea.vmem [#allocation1], 16
        %1108 = vst [vmem:[%s1107] ss:$2 sm:$0xff] %v1103
        %v1109 = vld.sshfl [vmem:[#allocation1] sm:$0xff pattern:$0x75316420]
        %v1110 = vld.sshfl [vmem:[#allocation1 + $0x8] sm:$0xff pattern:$0x75316420]
        %v1111 = vld.sshfl [vmem:[#allocation1 + $0x10] sm:$0xff pattern:$0x75316420]
        %v1115 = vsel %vm414, %v1109, 0.0
        %v1116 = vsel %vm414, %v1110, 0.0
        %v1117 = vadd.f32 %v1115, %v1116
        %v1118 = vsel %vm414, %v1111, 0.0
        %v1119 = vadd.f32 %v1117, %v1118
        %1120 = vadd.xlane.f32.xlu0 %v1119
        %v1121 = vpop.xlane.xlu0 %1120
        %1122 = vst.msk [vmem:[%s318] sm:$0xf] %vm1100, %v1121
        %s1123 = sand.u32 %s115, 1
        %s1124 = scalar_lea.sflag [#allocation5], %s1123
        %s1125 = sand.u32 %s115, 1
        %s1126 = smul.addr %s1125, 12
        %s1127 = scalar_lea.vmem [#allocation4], %s1126
        %s1128 = sand.u32 %s143, 1
        %s1129 = scalar_lea.sflag [#allocation7], %s1128
        %s1130 = sand.u32 %s143, 1
        %s1131 = smul.addr %s1130, 12
        %s1132 = scalar_lea.vmem [#allocation6], %s1131
        %p1133 = scmp.lt.s32.totalorder %s29, 1
        %s1134 = scalar_select %p1133, %s29, 1
        %p1135 = scmp.lt.s32.totalorder %s30, 2
        %s1136 = scalar_select %p1135, %s30, 2
        %s1137 = smul.addr %s1134, 3
        %s1138 = sadd.s32 %s1136, %s1137
        %s1139 = smul.addr %s1138, 4
        %s1140 = scalar_lea.vmem %s6, %s1139
        %p1141 = scmp.lt.s32.totalorder %s29, 1
        %s1142 = scalar_select %p1141, %s29, 1
        %p1143 = scmp.lt.s32.totalorder %s30, 2
        %s1144 = scalar_select %p1143, %s30, 2
        %s1145 = smul.addr %s1142, 3
        %s1146 = sadd.s32 %s1144, %s1145
        %s1147 = smul.addr %s1146, 4
        %s1148 = scalar_lea.vmem %s7, %s1147
        // Predicated region
        $region55: #{tpu_custom_call.1} parent=31 // pred_check
          %p1149 = pneg %p125
        $region56: #{tpu_custom_call.1} parent=31 // pred_check_branch
          %1151 = sbr.rel (%p1149) target = $region58
        $region57: #{tpu_custom_call.1} parent=31 // pred_region
          %s1152 = smul.u32 3, %s30
          %1154 = vsyncadd %s1124, 0
          %s1155 = smul.addr %s29, 9
          %s1156 = sadd.s32 %s1152, %s1155
          %s1157 = smul.addr %s1156, 4
          %s1158 = scalar_lea.hbm %s4, %s1157
          %s1160 = sshll.u32 %s1127, 4
          %s1161 = int_to_ptr.vmem [resolvable:$true] %s1160
          %s1162 = sshll.u32 %s1158, 4
          %s1163 = int_to_ptr.hbm [resolvable:$true] %s1162
          %1165 = dma.vmem_to_hbm [thread:$0]  %s1161, 192, %s1163, %s1124
        $region58: #{tpu_custom_call.1} parent=31 // pred_fallthru
          _
        // Predicated region
        $region59: #{tpu_custom_call.1} parent=31 // pred_check
          %p1166 = pneg %p153
        $region60: #{tpu_custom_call.1} parent=31 // pred_check_branch
          %1168 = sbr.rel (%p1166) target = $region62
        $region61: #{tpu_custom_call.1} parent=31 // pred_region
          %s1169 = smul.u32 3, %s30
          %1171 = vsyncadd %s1129, 0
          %s1172 = smul.addr %s29, 9
          %s1173 = sadd.s32 %s1169, %s1172
          %s1174 = smul.addr %s1173, 4
          %s1175 = scalar_lea.hbm %s5, %s1174
          %s1177 = sshll.u32 %s1132, 4
          %s1178 = int_to_ptr.vmem [resolvable:$true] %s1177
          %s1179 = sshll.u32 %s1175, 4
          %s1180 = int_to_ptr.hbm [resolvable:$true] %s1179
          %1182 = dma.vmem_to_hbm [thread:$0]  %s1178, 192, %s1180, %s1129
        $region62: #{tpu_custom_call.1} parent=31 // pred_fallthru
          _
        // Predicated region
        $region63: #{tpu_custom_call.1} parent=31 // pred_check
          %p1183 = pneg %p181
        $region64: #{tpu_custom_call.1} parent=31 // pred_check_branch
          %1185 = sbr.rel (%p1183) target = $region66
        $region65: #{tpu_custom_call.1} parent=31 // pred_region
          _
        $region66: #{tpu_custom_call.1} parent=31 // pred_fallthru
          _
        // Predicated region
        $region67: #{tpu_custom_call.1} parent=31 // pred_check
          %p1186 = pneg %p209
        $region68: #{tpu_custom_call.1} parent=31 // pred_check_branch
          %1188 = sbr.rel (%p1186) target = $region70
        $region69: #{tpu_custom_call.1} parent=31 // pred_region
          _
        $region70: #{tpu_custom_call.1} parent=31 // pred_fallthru
          _
      $region32: #{tpu_custom_call.1} parent=5 // pred_fallthru
        _
      %p1189 = scmp.le.s32.totalorder 2, %s20
      // Predicated region
      $region71: #{tpu_custom_call.1} parent=5 // pred_check
        %p1190 = pneg %p1189
      $region72: #{tpu_custom_call.1} parent=5 // pred_check_branch
        %1192 = sbr.rel (%p1190) target = $region74
      $region73: #{tpu_custom_call.1} parent=5 // pred_region
        %s1193 = ssub.s32 %s20, 2
        // Predicated region
        $region75: #{tpu_custom_call.1} parent=73 // pred_check
          %p1194 = pneg %p131
        $region76: #{tpu_custom_call.1} parent=73 // pred_check_branch
          %1196 = sbr.rel (%p1194) target = $region78
        $region77: #{tpu_custom_call.1} parent=73 // pred_region
          %s1197 = sand.u32 %s116, 1
          %s1198 = scalar_lea.sflag [#allocation5], %s1197
          %s1199 = sand.u32 %s116, 1
          %s1200 = smul.addr %s1199, 12
          %s1201 = scalar_lea.vmem [#allocation4], %s1200
          %1203 = dma.done %s1198, 192
        $region78: #{tpu_custom_call.1} parent=73 // pred_fallthru
          _
        // Predicated region
        $region79: #{tpu_custom_call.1} parent=73 // pred_check
          %p1204 = pneg %p159
        $region80: #{tpu_custom_call.1} parent=73 // pred_check_branch
          %1206 = sbr.rel (%p1204) target = $region82
        $region81: #{tpu_custom_call.1} parent=73 // pred_region
          %s1207 = sand.u32 %s144, 1
          %s1208 = scalar_lea.sflag [#allocation7], %s1207
          %s1209 = sand.u32 %s144, 1
          %s1210 = smul.addr %s1209, 12
          %s1211 = scalar_lea.vmem [#allocation6], %s1210
          %1213 = dma.done %s1208, 192
        $region82: #{tpu_custom_call.1} parent=73 // pred_fallthru
          _
        // Predicated region
        $region83: #{tpu_custom_call.1} parent=73 // pred_check
          %p1214 = pneg %p187
        $region84: #{tpu_custom_call.1} parent=73 // pred_check_branch
          %1216 = sbr.rel (%p1214) target = $region86
        $region85: #{tpu_custom_call.1} parent=73 // pred_region
          %p1217 = scmp.lt.s32.totalorder %s31, 1
          %s1218 = scalar_select %p1217, %s31, 1
          %p1219 = scmp.lt.s32.totalorder %s32, 2
          %s1220 = scalar_select %p1219, %s32, 2
          %s1221 = smul.addr %s1218, 3
          %s1222 = sadd.s32 %s1220, %s1221
          %s1223 = smul.addr %s1222, 4
          %s1224 = scalar_lea.vmem %s6, %s1223
        $region86: #{tpu_custom_call.1} parent=73 // pred_fallthru
          _
        // Predicated region
        $region87: #{tpu_custom_call.1} parent=73 // pred_check
          %p1225 = pneg %p215
        $region88: #{tpu_custom_call.1} parent=73 // pred_check_branch
          %1227 = sbr.rel (%p1225) target = $region90
        $region89: #{tpu_custom_call.1} parent=73 // pred_region
          %p1228 = scmp.lt.s32.totalorder %s31, 1
          %s1229 = scalar_select %p1228, %s31, 1
          %p1230 = scmp.lt.s32.totalorder %s32, 2
          %s1231 = scalar_select %p1230, %s32, 2
          %s1232 = smul.addr %s1229, 3
          %s1233 = sadd.s32 %s1231, %s1232
          %s1234 = smul.addr %s1233, 4
          %s1235 = scalar_lea.vmem %s7, %s1234
        $region90: #{tpu_custom_call.1} parent=73 // pred_fallthru
          _
      $region74: #{tpu_custom_call.1} parent=5 // pred_fallthru
        _
    $region6: #{tpu_custom_call.1} parent=1 // loop_footer
      %s24 = sadd.s32 1, %s20
    $region7: #{tpu_custom_call.1} parent=1 // loop_footer_branch
      %19 = sbr.rel target = $region3
    $region8: #{tpu_custom_call.1} parent=1 // loop_exit
      _
    %1236 = vsyncpa [#allocation5], 1
    %s1237 = scalar_lea.sflag [#allocation5], 1
    %1238 = vsyncpa %s1237, 1
    %1239 = vsyncpa [#allocation7], 1
    %s1240 = scalar_lea.sflag [#allocation7], 1
    %1241 = vsyncpa %s1240, 1
  %1242 = vsyncmov [#allocation3]
  %s1243 = vpop.sfrf %1242
  %p1244 = scmp.eq.s32.totalorder %s1243, 0
  %p1245 = pneg %p1244
  %1247 = shalt.err (%p1245)

</llo_original>
